<compile_context>
chip_gen: v7x
topology: tpu7x:2x2x1
jax: 0.10.0
libtpu: 0.0.40
codegen_flags: <defaults>
</compile_context>

<pallas_src>
import functools

import numpy as np
import jax
import jax.numpy as jnp
from jax.experimental import pallas as pl
from jax.experimental.pallas import tpu as pltpu

# ---- config (matches the PyTorch module, kept small) ----
IMGSIZE = 16          # must be a multiple of 16
NC = 2                # per-image channels; PacGAN2 packs 2 images -> conv in = NC*2
NDF = 8
NGF = 8               # BatchNorm width uses ngf*mult*2; ngf == ndf here
NEG_SLOPE = 0.2
BN_EPS = 1e-5
LANE = 128


# ------------------------- host-side constant construction -------------------------

def _conv_dense_matrix(w_oihw, H, W, stride, pad, in_order):
    """Dense operator D with flat_out = flat_in @ D for one Conv2d (bias=False).

    flat_in  : length H*W*Cin, ordered per `in_order`:
                 "chw": idx = ci*(H*W) + ih*W + iw   (flattened NCHW, for layer 0)
                 "hwc": idx = (ih*W + iw)*Cin + ci   (internal layout)
    flat_out : length Ho*Wo*Cout, ordered (oh, ow, co)  ("hwc" of the next layer)
    """
    w = np.asarray(w_oihw, np.float32)
    Cout, Cin, KH, KW = w.shape
    Ho = (H + 2 * pad - KH) // stride + 1
    Wo = (W + 2 * pad - KW) // stride + 1
    D = np.zeros((H * W * Cin, Ho * Wo * Cout), np.float32)
    for oh in range(Ho):
        for ow in range(Wo):
            col0 = (oh * Wo + ow) * Cout
            for ki in range(KH):
                ih = oh * stride + ki - pad
                if ih < 0 or ih >= H:
                    continue
                for kj in range(KW):
                    iw = ow * stride + kj - pad
                    if iw < 0 or iw >= W:
                        continue
                    blk = w[:, :, ki, kj].T          # (Cin, Cout)
                    for ci in range(Cin):
                        if in_order == "chw":
                            row = ci * (H * W) + ih * W + iw
                        else:
                            row = (ih * W + iw) * Cin + ci
                        D[row, col0:col0 + Cout] += blk[ci]
    return D, Ho, Wo


def build_discriminator(key, imgsize, nc, ndf, ngf):
    """Returns (params: pytree of jnp arrays, meta: static config)."""
    assert imgsize % 16 == 0, "image size has to be a multiple of 16"

    def conv_w(k, cin, cout):
        # DCGAN-style N(0, 0.02) init; deterministic via PRNGKey.
        return 0.02 * jax.random.normal(k, (cout, cin, 4, 4), jnp.float32)

    params = {}

    # Start-Conv2d (accepts flattened NCHW input directly).  Stored bf16.
    k0, key = jax.random.split(key)
    d0, H, W = _conv_dense_matrix(conv_w(k0, nc * 2, ndf), imgsize, imgsize, 2, 1, "chw")
    params["d0"] = jnp.asarray(d0, jnp.bfloat16)

    # Middle-Conv2d + Middle-BatchNorm2d (+ LeakyReLU fused in the kernel)
    middle = []
    mid_spatial = []
    img = imgsize // 2
    mult = 1
    while img > 4:
        kw_, key = jax.random.split(key)
        cin, cout = ndf * mult, ndf * mult * 2
        d, Ho, Wo = _conv_dense_matrix(conv_w(kw_, cin, cout), img, img, 2, 1, "hwc")
        cbn = ngf * mult * 2                       # BatchNorm2d(ngf*mult*2)
        assert cbn == cout                         # true when ndf == ngf (as here)
        ind = np.zeros((Ho * Wo * cout, cbn), np.float32)
        ind[np.arange(Ho * Wo * cout), np.arange(Ho * Wo * cout) % cout] = 1.0
        middle.append({
            "d": jnp.asarray(d, jnp.bfloat16),          # conv operator (bf16 streamed)
            "ind": jnp.asarray(ind),                    # (HW*C, C)  reduce cols -> channels (f32, exact)
            "indT": jnp.asarray(ind.T.copy()),          # (C, HW*C)  broadcast channels -> cols (f32, exact)
            "gamma": jnp.ones((1, cbn), jnp.float32),   # BatchNorm2d default weight
            "beta": jnp.zeros((1, cbn), jnp.float32),   # BatchNorm2d default bias
        })
        mid_spatial.append(Ho * Wo)
        img //= 2
        mult *= 2
    params["middle"] = middle

    # End-Conv2d (4x4 -> 1x1, no pad), zero-padded to 128 lanes for a lane-dense
    # output store; only column 0 is meaningful.
    ke, _ = jax.random.split(key)
    de, _, _ = _conv_dense_matrix(conv_w(ke, ndf * mult, 1), img, img, 1, 0, "hwc")
    de_pad = np.zeros((de.shape[0], LANE), np.float32)
    de_pad[:, :de.shape[1]] = de
    params["d_end"] = jnp.asarray(de_pad, jnp.bfloat16)

    meta = {"mid_spatial": tuple(mid_spatial)}
    return params, meta


# ------------------------- fused Pallas kernel -------------------------

def _make_fused_kernel(n_middle, counts, neg_slope, eps, b_real, b_pad):
    """Whole-forward kernel.  Ref order:
       x, d0, [d, ind, indT, gamma, beta] * n_middle, d_end, out
    """
    def kernel(*refs):
        x_ref, d0_ref = refs[0], refs[1]
        o_ref = refs[-1]

        # Start-Conv2d (bf16 x bf16 -> f32 acc) + Start-LeakyReLU
        a = jnp.dot(x_ref[...], d0_ref[...], preferred_element_type=jnp.float32)
        a = jnp.maximum(a, neg_slope * a)

        idx = 2
        for l in range(n_middle):
            d_ref, ind_ref, indT_ref, g_ref, b_ref = refs[idx:idx + 5]
            idx += 5
            # Middle-Conv2d (no bias); activations fed to MXU in bf16, f32 accumulation.
            y = jnp.dot(a.astype(jnp.bfloat16), d_ref[...],
                        preferred_element_type=jnp.float32)
            # BatchNorm2d over (batch, spatial) per channel, single pass (E[x^2]-mean^2).
            # Stats math stays in f32.  Zero-padded batch rows contribute exactly 0 to
            # the sums, so normalizing by the REAL count keeps the stats exact.
            inv_n = 1.0 / counts[l]
            s1 = jnp.sum(y, axis=0, keepdims=True)          # (1, HW*C)  f32
            s2 = jnp.sum(y * y, axis=0, keepdims=True)      # (1, HW*C)  f32
            stats = jnp.dot(jnp.concatenate([s1, s2], axis=0), ind_ref[...],
                            preferred_element_type=jnp.float32) * inv_n       # (2, C)
            mean_c = stats[0:1, :]
            msq_c = stats[1:2, :]
            var_c = jnp.maximum(msq_c - mean_c * mean_c, 0.0)                  # biased var
            scale_c = g_ref[...] * jax.lax.rsqrt(var_c + eps)                  # (1, C)
            shift_c = b_ref[...] - mean_c * scale_c                            # (1, C)
            # Fused channel -> lane broadcast (one M=2 push instead of two M=1 pushes).
            bc = jnp.dot(jnp.concatenate([scale_c, shift_c], axis=0), indT_ref[...],
                         preferred_element_type=jnp.float32)                   # (2, HW*C)
            y = y * bc[0:1, :] + bc[1:2, :]
            # Middle-LeakyReLU
            a = jnp.maximum(y, neg_slope * y)
            # Re-zero padded batch rows so they cannot contaminate the NEXT layer's
            # BN statistics (only needed when there is a next middle layer).
            if b_pad > b_real and l + 1 < n_middle:
                rows = jax.lax.broadcasted_iota(jnp.int32, (b_pad, 1), 0)
                a = jnp.where(rows < b_real, a, 0.0)

        # End-Conv2d (lane-dense: 128 output columns, only column 0 is real).
        o_ref[...] = jnp.dot(a.astype(jnp.bfloat16), refs[idx][...],
                             preferred_element_type=jnp.float32)

    return kernel


def discriminator_forward(params, x_nchw, *, mid_spatial):
    B = x_nchw.shape[0]
    B_pad = max(8, ((B + 7) // 8) * 8)          # fill MXU M-dim / f32 sublanes

    x2d = x_nchw.reshape(B, -1).astype(jnp.bfloat16)   # flattened NCHW; d0 expects this order
    if B_pad > B:
        x2d = jnp.pad(x2d, ((0, B_pad - B), (0, 0)))

    inputs = [x2d, params["d0"]]
    for layer in params["middle"]:
        inputs += [layer["d"], layer["ind"], layer["indT"], layer["gamma"], layer["beta"]]
    inputs.append(params["d_end"])

    counts = tuple(float(B * s) for s in mid_spatial)   # REAL samples per channel for BN
    kernel = _make_fused_kernel(len(params["middle"]), counts, NEG_SLOPE, BN_EPS, B, B_pad)

    out = pl.pallas_call(
        kernel,
        out_shape=jax.ShapeDtypeStruct((B_pad, LANE), jnp.float32),
        grid=(1,),
        in_specs=[pl.BlockSpec(a.shape, lambda i: (0, 0)) for a in inputs],
        out_specs=pl.BlockSpec((B_pad, LANE), lambda i: (0, 0)),
        compiler_params=pltpu.CompilerParams(
            dimension_semantics=("arbitrary",)),
    )(*inputs)

    # output.view(-1, 1).squeeze(1): real rows, real column.
    return out[:B, 0]


# ------------------------- demo -------------------------

if __name__ == "__main__":
    key = jax.random.PRNGKey(0)
    kx, kp = jax.random.split(key)
    B = 2
    x = jax.random.normal(kx, (B, NC * 2, IMGSIZE, IMGSIZE), jnp.float32)

    params, meta = build_discriminator(kp, IMGSIZE, NC, NDF, NGF)
    fwd = jax.jit(functools.partial(discriminator_forward,
                                    mid_spatial=meta["mid_spatial"]))

    out = fwd(params, x)
    jax.block_until_ready(out)
    assert out.shape == (B,), out.shape
    assert out.dtype == jnp.float32
    assert bool(jnp.all(jnp.isfinite(out)))
    print("KERNEL_OK")
</pallas_src>

<mosaic_0001>
module attributes {stable_mosaic.version = 11 : i64} {
  func.func @kernel(%arg0: i32, %arg1: memref<8x1024xbf16, #tpu.memory_space<vmem>>, %arg2: memref<1024x512xbf16, #tpu.memory_space<vmem>>, %arg3: memref<512x256xbf16, #tpu.memory_space<vmem>>, %arg4: memref<256x16xf32, #tpu.memory_space<vmem>>, %arg5: memref<16x256xf32, #tpu.memory_space<vmem>>, %arg6: memref<1x16xf32, #tpu.memory_space<vmem>>, %arg7: memref<1x16xf32, #tpu.memory_space<vmem>>, %arg8: memref<256x128xbf16, #tpu.memory_space<vmem>>, %arg9: memref<8x128xf32, #tpu.memory_space<vmem>>) attributes {dimension_semantics = [#tpu.dimension_semantics<arbitrary>], iteration_bounds = array<i64: 1>, scalar_prefetch = 0 : i64, scratch_operands = 0 : i64, tpu.core_type = #tpu.core_type<tc>, window_params = [{pipeline_mode = #tpu.pipeline_mode<synchronous>, transform_indices = @transform_0, window_bounds = array<i64: 8, 1024>}, {pipeline_mode = #tpu.pipeline_mode<synchronous>, transform_indices = @transform_1, window_bounds = array<i64: 1024, 512>}, {pipeline_mode = #tpu.pipeline_mode<synchronous>, transform_indices = @transform_2, window_bounds = array<i64: 512, 256>}, {pipeline_mode = #tpu.pipeline_mode<synchronous>, transform_indices = @transform_3, window_bounds = array<i64: 256, 16>}, {pipeline_mode = #tpu.pipeline_mode<synchronous>, transform_indices = @transform_4, window_bounds = array<i64: 16, 256>}, {pipeline_mode = #tpu.pipeline_mode<synchronous>, transform_indices = @transform_5, window_bounds = array<i64: 1, 16>}, {pipeline_mode = #tpu.pipeline_mode<synchronous>, transform_indices = @transform_6, window_bounds = array<i64: 1, 16>}, {pipeline_mode = #tpu.pipeline_mode<synchronous>, transform_indices = @transform_7, window_bounds = array<i64: 256, 128>}, {pipeline_mode = #tpu.pipeline_mode<synchronous>, transform_indices = @transform_8, window_bounds = array<i64: 8, 128>}]} {
    %c0 = arith.constant 0 : index
    %c0_0 = arith.constant 0 : index
    %0 = vector.load %arg1[%c0, %c0_0] : memref<8x1024xbf16, #tpu.memory_space<vmem>>, vector<8x1024xbf16>
    %c0_1 = arith.constant 0 : index
    %c0_2 = arith.constant 0 : index
    %1 = vector.load %arg2[%c0_1, %c0_2] : memref<1024x512xbf16, #tpu.memory_space<vmem>>, vector<1024x512xbf16>
    %cst = arith.constant dense<0.000000e+00> : vector<8x512xf32>
    %2 = tpu.matmul %0, %1, %cst {dimension_numbers = #tpu.dot_dimension_numbers<[1], [0], [0], [1], [0, 0, 1, 1], [], []>} : vector<8x1024xbf16>, vector<1024x512xbf16>, vector<8x512xf32> -> vector<8x512xf32>
    %cst_3 = arith.constant 2.000000e-01 : f32
    %3 = vector.broadcast %cst_3 : f32 to vector<8x512xf32>
    %4 = arith.mulf %3, %2 : vector<8x512xf32>
    %5 = arith.maximumf %2, %4 : vector<8x512xf32>
    %6 = arith.truncf %5 : vector<8x512xf32> to vector<8x512xbf16>
    %c0_4 = arith.constant 0 : index
    %c0_5 = arith.constant 0 : index
    %7 = vector.load %arg3[%c0_4, %c0_5] : memref<512x256xbf16, #tpu.memory_space<vmem>>, vector<512x256xbf16>
    %cst_6 = arith.constant dense<0.000000e+00> : vector<8x256xf32>
    %8 = tpu.matmul %6, %7, %cst_6 {dimension_numbers = #tpu.dot_dimension_numbers<[1], [0], [0], [1], [0, 0, 1, 1], [], []>} : vector<8x512xbf16>, vector<512x256xbf16>, vector<8x256xf32> -> vector<8x256xf32>
    %cst_7 = arith.constant dense<0.000000e+00> : vector<256xf32>
    %9 = vector.multi_reduction <add>, %8, %cst_7 [0] : vector<8x256xf32> to vector<256xf32>
    %10 = vector.shape_cast %9 : vector<256xf32> to vector<1x256xf32>
    %11 = arith.mulf %8, %8 : vector<8x256xf32>
    %cst_8 = arith.constant dense<0.000000e+00> : vector<256xf32>
    %12 = vector.multi_reduction <add>, %11, %cst_8 [0] : vector<8x256xf32> to vector<256xf32>
    %13 = vector.shape_cast %12 : vector<256xf32> to vector<1x256xf32>
    %14 = tpu.concatenate %10, %13 in 0 : vector<1x256xf32>, vector<1x256xf32> -> vector<2x256xf32>
    %c0_9 = arith.constant 0 : index
    %c0_10 = arith.constant 0 : index
    %15 = vector.load %arg4[%c0_9, %c0_10] : memref<256x16xf32, #tpu.memory_space<vmem>>, vector<256x16xf32>
    %cst_11 = arith.constant dense<0.000000e+00> : vector<2x16xf32>
    %16 = tpu.matmul %14, %15, %cst_11 {dimension_numbers = #tpu.dot_dimension_numbers<[1], [0], [0], [1], [0, 0, 1, 1], [], []>} : vector<2x256xf32>, vector<256x16xf32>, vector<2x16xf32> -> vector<2x16xf32>
    %cst_12 = arith.constant 3.125000e-02 : f32
    %17 = vector.broadcast %cst_12 : f32 to vector<2x16xf32>
    %18 = arith.mulf %16, %17 : vector<2x16xf32>
    %19 = vector.extract_strided_slice %18 {offsets = [0, 0], sizes = [1, 16], strides = [1, 1]} : vector<2x16xf32> to vector<1x16xf32>
    %20 = vector.extract_strided_slice %18 {offsets = [1, 0], sizes = [1, 16], strides = [1, 1]} : vector<2x16xf32> to vector<1x16xf32>
    %21 = arith.mulf %19, %19 : vector<1x16xf32>
    %22 = arith.subf %20, %21 : vector<1x16xf32>
    %cst_13 = arith.constant 0.000000e+00 : f32
    %23 = vector.broadcast %cst_13 : f32 to vector<1x16xf32>
    %24 = arith.maximumf %22, %23 : vector<1x16xf32>
    %c0_14 = arith.constant 0 : index
    %c0_15 = arith.constant 0 : index
    %25 = vector.load %arg6[%c0_14, %c0_15] : memref<1x16xf32, #tpu.memory_space<vmem>>, vector<1x16xf32>
    %cst_16 = arith.constant 9.99999974E-6 : f32
    %26 = vector.broadcast %cst_16 : f32 to vector<1x16xf32>
    %27 = arith.addf %24, %26 : vector<1x16xf32>
    %28 = math.rsqrt %27 : vector<1x16xf32>
    %29 = arith.mulf %25, %28 : vector<1x16xf32>
    %c0_17 = arith.constant 0 : index
    %c0_18 = arith.constant 0 : index
    %30 = vector.load %arg7[%c0_17, %c0_18] : memref<1x16xf32, #tpu.memory_space<vmem>>, vector<1x16xf32>
    %31 = arith.mulf %19, %29 : vector<1x16xf32>
    %32 = arith.subf %30, %31 : vector<1x16xf32>
    %33 = tpu.concatenate %29, %32 in 0 : vector<1x16xf32>, vector<1x16xf32> -> vector<2x16xf32>
    %c0_19 = arith.constant 0 : index
    %c0_20 = arith.constant 0 : index
    %34 = vector.load %arg5[%c0_19, %c0_20] : memref<16x256xf32, #tpu.memory_space<vmem>>, vector<16x256xf32>
    %cst_21 = arith.constant dense<0.000000e+00> : vector<2x256xf32>
    %35 = tpu.matmul %33, %34, %cst_21 {dimension_numbers = #tpu.dot_dimension_numbers<[1], [0], [0], [1], [0, 0, 1, 1], [], []>} : vector<2x16xf32>, vector<16x256xf32>, vector<2x256xf32> -> vector<2x256xf32>
    %36 = vector.extract_strided_slice %35 {offsets = [0, 0], sizes = [1, 256], strides = [1, 1]} : vector<2x256xf32> to vector<1x256xf32>
    %37 = vector.broadcast %36 : vector<1x256xf32> to vector<8x256xf32>
    %38 = arith.mulf %8, %37 : vector<8x256xf32>
    %39 = vector.extract_strided_slice %35 {offsets = [1, 0], sizes = [1, 256], strides = [1, 1]} : vector<2x256xf32> to vector<1x256xf32>
    %40 = vector.broadcast %39 : vector<1x256xf32> to vector<8x256xf32>
    %41 = arith.addf %38, %40 : vector<8x256xf32>
    %cst_22 = arith.constant 2.000000e-01 : f32
    %42 = vector.broadcast %cst_22 : f32 to vector<8x256xf32>
    %43 = arith.mulf %42, %41 : vector<8x256xf32>
    %44 = arith.maximumf %41, %43 : vector<8x256xf32>
    %45 = arith.truncf %44 : vector<8x256xf32> to vector<8x256xbf16>
    %c0_23 = arith.constant 0 : index
    %c0_24 = arith.constant 0 : index
    %46 = vector.load %arg8[%c0_23, %c0_24] : memref<256x128xbf16, #tpu.memory_space<vmem>>, vector<256x128xbf16>
    %cst_25 = arith.constant dense<0.000000e+00> : vector<8x128xf32>
    %47 = tpu.matmul %45, %46, %cst_25 {dimension_numbers = #tpu.dot_dimension_numbers<[1], [0], [0], [1], [0, 0, 1, 1], [], []>} : vector<8x256xbf16>, vector<256x128xbf16>, vector<8x128xf32> -> vector<8x128xf32>
    %c0_26 = arith.constant 0 : index
    %c0_27 = arith.constant 0 : index
    %48 = vector.load %arg9[%c0_26, %c0_27] : memref<8x128xf32, #tpu.memory_space<vmem>>, vector<8x128xf32>
    tpu.vector_store %arg9[%c0_26, %c0_27], %47 {strides = array<i32>} : memref<8x128xf32, #tpu.memory_space<vmem>>, vector<8x128xf32>,
    return
  }
  func.func @transform_0(%arg0: i32) -> (i32, i32) {
    %c0_i32 = arith.constant 0 : i32
    %c0_i32_0 = arith.constant 0 : i32
    %c0_i32_1 = arith.constant 0 : i32
    return %c0_i32, %c0_i32_0 : i32, i32
  }
  func.func @transform_1(%arg0: i32) -> (i32, i32) {
    %c0_i32 = arith.constant 0 : i32
    %c0_i32_0 = arith.constant 0 : i32
    %c0_i32_1 = arith.constant 0 : i32
    return %c0_i32, %c0_i32_0 : i32, i32
  }
  func.func @transform_2(%arg0: i32) -> (i32, i32) {
    %c0_i32 = arith.constant 0 : i32
    %c0_i32_0 = arith.constant 0 : i32
    %c0_i32_1 = arith.constant 0 : i32
    return %c0_i32, %c0_i32_0 : i32, i32
  }
  func.func @transform_3(%arg0: i32) -> (i32, i32) {
    %c0_i32 = arith.constant 0 : i32
    %c0_i32_0 = arith.constant 0 : i32
    %c0_i32_1 = arith.constant 0 : i32
    return %c0_i32, %c0_i32_0 : i32, i32
  }
  func.func @transform_4(%arg0: i32) -> (i32, i32) {
    %c0_i32 = arith.constant 0 : i32
    %c0_i32_0 = arith.constant 0 : i32
    %c0_i32_1 = arith.constant 0 : i32
    return %c0_i32, %c0_i32_0 : i32, i32
  }
  func.func @transform_5(%arg0: i32) -> (i32, i32) {
    %c0_i32 = arith.constant 0 : i32
    %c0_i32_0 = arith.constant 0 : i32
    %c0_i32_1 = arith.constant 0 : i32
    return %c0_i32, %c0_i32_0 : i32, i32
  }
  func.func @transform_6(%arg0: i32) -> (i32, i32) {
    %c0_i32 = arith.constant 0 : i32
    %c0_i32_0 = arith.constant 0 : i32
    %c0_i32_1 = arith.constant 0 : i32
    return %c0_i32, %c0_i32_0 : i32, i32
  }
  func.func @transform_7(%arg0: i32) -> (i32, i32) {
    %c0_i32 = arith.constant 0 : i32
    %c0_i32_0 = arith.constant 0 : i32
    %c0_i32_1 = arith.constant 0 : i32
    return %c0_i32, %c0_i32_0 : i32, i32
  }
  func.func @transform_8(%arg0: i32) -> (i32, i32) {
    %c0_i32 = arith.constant 0 : i32
    %c0_i32_0 = arith.constant 0 : i32
    %c0_i32_1 = arith.constant 0 : i32
    return %c0_i32, %c0_i32_0 : i32, i32
  }
}

</mosaic_0001>

<llo_original>
// kernel: discriminator_forward.1
$region0: #{discriminator_forward.1}
  #allocation0 [shape = 'u32[]', space=smem, size = 0x4, offset = 0x4, fixed_abs, tag = 'smem constant byte address 0x4 - core index']
  #allocation1 [shape = 'u32[144,128]{1,0:T(1,128)}', space=vmem, size = 0x12000, scoped, tag = 'internal scratch']
  %s0 = inlined_call_operand.vmem [shape: bf16[8,1024], index: 0, kind: input, shape index: {}]
  %s1 = inlined_call_operand.hbm [shape: bf16[1024,512], index: 1, kind: input, shape index: {}]
  %s2 = inlined_call_operand.vmem [shape: bf16[512,256], index: 2, kind: input, shape index: {}]
  %s3 = inlined_call_operand.vmem [shape: f32[256,16], index: 3, kind: input, shape index: {}]
  %s4 = inlined_call_operand.vmem [shape: f32[16,256], index: 4, kind: input, shape index: {}]
  %s5 = inlined_call_operand.vmem [shape: f32[1,16], index: 5, kind: input, shape index: {}]
  %s6 = inlined_call_operand.vmem [shape: f32[1,16], index: 6, kind: input, shape index: {}]
  %s7 = inlined_call_operand.hbm [shape: bf16[256,128], index: 7, kind: input, shape index: {}]
  %s8 = inlined_call_operand.vmem [shape: f32[8,128], index: 8, kind: output, shape index: {}]
  %s9 = sld [smem:[#allocation0]]
  $region50: #{discriminator_forward.1} parent=0
    _
  %s11 = ssub.s32 1, %s9
  %s12 = scalar_select 0, %s11, %s9
  $region1: #{discriminator_forward.1} parent=0
    #allocation2 [shape = 'u8[1048576]{0}', space=vmem, size = 0x100000, scoped, tag = 'input window, operand 1, single buffered']
    #allocation3 [shape = 's32[1]{0}', space=sflag, size = 0x4, scoped, tag = 'scoped memory for discriminator_forward.1']
    #allocation4 [shape = 'u8[65536]{0}', space=vmem, size = 0x10000, scoped, tag = 'input window, operand 7, single buffered']
    #allocation5 [shape = 's32[1]{0}', space=sflag, size = 0x4, scoped, tag = 'scoped memory for discriminator_forward.1']
    %13 = vsyncpa [#allocation3], 0
    %14 = vsyncpa [#allocation5], 0
    // Predicated region
    $region2: #{discriminator_forward.1} parent=1 // pred_check
      _
    $region3: #{discriminator_forward.1} parent=1 // pred_check_branch
      %16 = sbr.rel (0) target = $region5
    $region4: #{discriminator_forward.1} parent=1 // pred_region
      _
    $region5: #{discriminator_forward.1} parent=1 // pred_fallthru
      _
    // Predicated region
    $region6: #{discriminator_forward.1} parent=1 // pred_check
      _
    $region7: #{discriminator_forward.1} parent=1 // pred_check_branch
      %18 = sbr.rel (0) target = $region9
    $region8: #{discriminator_forward.1} parent=1 // pred_region
      %s20 = ssub.s32 32768, 32768
      %21 = vsyncadd [#allocation3], %s20
      %s22 = sshll.u32 [#allocation2], 4
      %s23 = int_to_ptr.vmem [resolvable:$true] %s22
      %28 = dma.hbm_to_vmem [thread:$0]  %s1, 32768, %s23, [#allocation3], 256, 256, 16
    $region9: #{discriminator_forward.1} parent=1 // pred_fallthru
      _
    // Predicated region
    $region10: #{discriminator_forward.1} parent=1 // pred_check
      _
    $region11: #{discriminator_forward.1} parent=1 // pred_check_branch
      %30 = sbr.rel (0) target = $region13
    $region12: #{discriminator_forward.1} parent=1 // pred_region
      _
    $region13: #{discriminator_forward.1} parent=1 // pred_fallthru
      _
    // Predicated region
    $region14: #{discriminator_forward.1} parent=1 // pred_check
      _
    $region15: #{discriminator_forward.1} parent=1 // pred_check_branch
      %32 = sbr.rel (0) target = $region17
    $region16: #{discriminator_forward.1} parent=1 // pred_region
      _
    $region17: #{discriminator_forward.1} parent=1 // pred_fallthru
      _
    // Predicated region
    $region18: #{discriminator_forward.1} parent=1 // pred_check
      _
    $region19: #{discriminator_forward.1} parent=1 // pred_check_branch
      %34 = sbr.rel (0) target = $region21
    $region20: #{discriminator_forward.1} parent=1 // pred_region
      _
    $region21: #{discriminator_forward.1} parent=1 // pred_fallthru
      _
    // Predicated region
    $region22: #{discriminator_forward.1} parent=1 // pred_check
      _
    $region23: #{discriminator_forward.1} parent=1 // pred_check_branch
      %36 = sbr.rel (0) target = $region25
    $region24: #{discriminator_forward.1} parent=1 // pred_region
      _
    $region25: #{discriminator_forward.1} parent=1 // pred_fallthru
      _
    // Predicated region
    $region26: #{discriminator_forward.1} parent=1 // pred_check
      _
    $region27: #{discriminator_forward.1} parent=1 // pred_check_branch
      %38 = sbr.rel (0) target = $region29
    $region28: #{discriminator_forward.1} parent=1 // pred_region
      _
    $region29: #{discriminator_forward.1} parent=1 // pred_fallthru
      _
    // Predicated region
    $region30: #{discriminator_forward.1} parent=1 // pred_check
      _
    $region31: #{discriminator_forward.1} parent=1 // pred_check_branch
      %40 = sbr.rel (0) target = $region33
    $region32: #{discriminator_forward.1} parent=1 // pred_region
      %s42 = ssub.s32 2048, 2048
      %43 = vsyncadd [#allocation5], %s42
      %s44 = sshll.u32 [#allocation4], 4
      %s45 = int_to_ptr.vmem [resolvable:$true] %s44
      %50 = dma.hbm_to_vmem [thread:$0]  %s7, 2048, %s45, [#allocation5], 64, 64, 4
    $region33: #{discriminator_forward.1} parent=1 // pred_fallthru
      _
    // Predicated region
    $region34: #{discriminator_forward.1} parent=1 // pred_check
      _
    $region35: #{discriminator_forward.1} parent=1 // pred_check_branch
      %52 = sbr.rel (0) target = $region37
    $region36: #{discriminator_forward.1} parent=1 // pred_region
      %53 = dma.done [#allocation3], 32768
    $region37: #{discriminator_forward.1} parent=1 // pred_fallthru
      _
    // Predicated region
    $region38: #{discriminator_forward.1} parent=1 // pred_check
      _
    $region39: #{discriminator_forward.1} parent=1 // pred_check_branch
      %55 = sbr.rel (0) target = $region41
    $region40: #{discriminator_forward.1} parent=1 // pred_region
      %56 = dma.done [#allocation5], 2048
    $region41: #{discriminator_forward.1} parent=1 // pred_fallthru
      _
    %v58 = vld [vmem:[%s0] sm:$0xff]
    %v59 = vld [vmem:[%s0 + $0x8] sm:$0xff]
    %v60 = vld [vmem:[%s0 + $0x10] sm:$0xff]
    %v61 = vld [vmem:[%s0 + $0x18] sm:$0xff]
    %v62 = vld [vmem:[#allocation2] sm:$0xff]
    %v63 = vld [vmem:[#allocation2 + $0x8] sm:$0xff]
    %v64 = vld [vmem:[#allocation2 + $0x10] sm:$0xff]
    %v65 = vld [vmem:[#allocation2 + $0x18] sm:$0xff]
    %v66 = vld [vmem:[#allocation2 + $0x20] sm:$0xff]
    %v67 = vld [vmem:[#allocation2 + $0x28] sm:$0xff]
    %v68 = vld [vmem:[#allocation2 + $0x30] sm:$0xff]
    %v69 = vld [vmem:[#allocation2 + $0x38] sm:$0xff]
    %v70 = vld [vmem:[#allocation2 + $0x40] sm:$0xff]
    %v71 = vld [vmem:[#allocation2 + $0x48] sm:$0xff]
    %v72 = vld [vmem:[#allocation2 + $0x50] sm:$0xff]
    %v73 = vld [vmem:[#allocation2 + $0x58] sm:$0xff]
    %v74 = vld [vmem:[#allocation2 + $0x60] sm:$0xff]
    %v75 = vld [vmem:[#allocation2 + $0x68] sm:$0xff]
    %v76 = vld [vmem:[#allocation2 + $0x70] sm:$0xff]
    %v77 = vld [vmem:[#allocation2 + $0x78] sm:$0xff]
    %v78 = vld [vmem:[#allocation2 + $0x80] sm:$0xff]
    %v79 = vld [vmem:[#allocation2 + $0x88] sm:$0xff]
    %v80 = vld [vmem:[#allocation2 + $0x90] sm:$0xff]
    %v81 = vld [vmem:[#allocation2 + $0x98] sm:$0xff]
    %v82 = vld [vmem:[#allocation2 + $0xa0] sm:$0xff]
    %v83 = vld [vmem:[#allocation2 + $0xa8] sm:$0xff]
    %v84 = vld [vmem:[#allocation2 + $0xb0] sm:$0xff]
    %v85 = vld [vmem:[#allocation2 + $0xb8] sm:$0xff]
    %v86 = vld [vmem:[#allocation2 + $0xc0] sm:$0xff]
    %v87 = vld [vmem:[#allocation2 + $0xc8] sm:$0xff]
    %v88 = vld [vmem:[#allocation2 + $0xd0] sm:$0xff]
    %v89 = vld [vmem:[#allocation2 + $0xd8] sm:$0xff]
    %v90 = vld [vmem:[#allocation2 + $0xe0] sm:$0xff]
    %v91 = vld [vmem:[#allocation2 + $0xe8] sm:$0xff]
    %v92 = vld [vmem:[#allocation2 + $0xf0] sm:$0xff]
    %v93 = vld [vmem:[#allocation2 + $0xf8] sm:$0xff]
    %v94 = vld [vmem:[#allocation2 + $0x100] sm:$0xff]
    %v95 = vld [vmem:[#allocation2 + $0x108] sm:$0xff]
    %v96 = vld [vmem:[#allocation2 + $0x110] sm:$0xff]
    %v97 = vld [vmem:[#allocation2 + $0x118] sm:$0xff]
    %v98 = vld [vmem:[#allocation2 + $0x120] sm:$0xff]
    %v99 = vld [vmem:[#allocation2 + $0x128] sm:$0xff]
    %v100 = vld [vmem:[#allocation2 + $0x130] sm:$0xff]
    %v101 = vld [vmem:[#allocation2 + $0x138] sm:$0xff]
    %v102 = vld [vmem:[#allocation2 + $0x140] sm:$0xff]
    %v103 = vld [vmem:[#allocation2 + $0x148] sm:$0xff]
    %v104 = vld [vmem:[#allocation2 + $0x150] sm:$0xff]
    %v105 = vld [vmem:[#allocation2 + $0x158] sm:$0xff]
    %v106 = vld [vmem:[#allocation2 + $0x160] sm:$0xff]
    %v107 = vld [vmem:[#allocation2 + $0x168] sm:$0xff]
    %v108 = vld [vmem:[#allocation2 + $0x170] sm:$0xff]
    %v109 = vld [vmem:[#allocation2 + $0x178] sm:$0xff]
    %v110 = vld [vmem:[#allocation2 + $0x180] sm:$0xff]
    %v111 = vld [vmem:[#allocation2 + $0x188] sm:$0xff]
    %v112 = vld [vmem:[#allocation2 + $0x190] sm:$0xff]
    %v113 = vld [vmem:[#allocation2 + $0x198] sm:$0xff]
    %v114 = vld [vmem:[#allocation2 + $0x1a0] sm:$0xff]
    %v115 = vld [vmem:[#allocation2 + $0x1a8] sm:$0xff]
    %v116 = vld [vmem:[#allocation2 + $0x1b0] sm:$0xff]
    %v117 = vld [vmem:[#allocation2 + $0x1b8] sm:$0xff]
    %v118 = vld [vmem:[#allocation2 + $0x1c0] sm:$0xff]
    %v119 = vld [vmem:[#allocation2 + $0x1c8] sm:$0xff]
    %v120 = vld [vmem:[#allocation2 + $0x1d0] sm:$0xff]
    %v121 = vld [vmem:[#allocation2 + $0x1d8] sm:$0xff]
    %v122 = vld [vmem:[#allocation2 + $0x1e0] sm:$0xff]
    %v123 = vld [vmem:[#allocation2 + $0x1e8] sm:$0xff]
    %v124 = vld [vmem:[#allocation2 + $0x1f0] sm:$0xff]
    %v125 = vld [vmem:[#allocation2 + $0x1f8] sm:$0xff]
    %v126 = vld [vmem:[#allocation2 + $0x200] sm:$0xff]
    %v127 = vld [vmem:[#allocation2 + $0x208] sm:$0xff]
    %v128 = vld [vmem:[#allocation2 + $0x210] sm:$0xff]
    %v129 = vld [vmem:[#allocation2 + $0x218] sm:$0xff]
    %v130 = vld [vmem:[#allocation2 + $0x220] sm:$0xff]
    %v131 = vld [vmem:[#allocation2 + $0x228] sm:$0xff]
    %v132 = vld [vmem:[#allocation2 + $0x230] sm:$0xff]
    %v133 = vld [vmem:[#allocation2 + $0x238] sm:$0xff]
    %v134 = vld [vmem:[#allocation2 + $0x240] sm:$0xff]
    %v135 = vld [vmem:[#allocation2 + $0x248] sm:$0xff]
    %v136 = vld [vmem:[#allocation2 + $0x250] sm:$0xff]
    %v137 = vld [vmem:[#allocation2 + $0x258] sm:$0xff]
    %v138 = vld [vmem:[#allocation2 + $0x260] sm:$0xff]
    %v139 = vld [vmem:[#allocation2 + $0x268] sm:$0xff]
    %v140 = vld [vmem:[#allocation2 + $0x270] sm:$0xff]
    %v141 = vld [vmem:[#allocation2 + $0x278] sm:$0xff]
    %v142 = vld [vmem:[#allocation2 + $0x280] sm:$0xff]
    %v143 = vld [vmem:[#allocation2 + $0x288] sm:$0xff]
    %v144 = vld [vmem:[#allocation2 + $0x290] sm:$0xff]
    %v145 = vld [vmem:[#allocation2 + $0x298] sm:$0xff]
    %v146 = vld [vmem:[#allocation2 + $0x2a0] sm:$0xff]
    %v147 = vld [vmem:[#allocation2 + $0x2a8] sm:$0xff]
    %v148 = vld [vmem:[#allocation2 + $0x2b0] sm:$0xff]
    %v149 = vld [vmem:[#allocation2 + $0x2b8] sm:$0xff]
    %v150 = vld [vmem:[#allocation2 + $0x2c0] sm:$0xff]
    %v151 = vld [vmem:[#allocation2 + $0x2c8] sm:$0xff]
    %v152 = vld [vmem:[#allocation2 + $0x2d0] sm:$0xff]
    %v153 = vld [vmem:[#allocation2 + $0x2d8] sm:$0xff]
    %v154 = vld [vmem:[#allocation2 + $0x2e0] sm:$0xff]
    %v155 = vld [vmem:[#allocation2 + $0x2e8] sm:$0xff]
    %v156 = vld [vmem:[#allocation2 + $0x2f0] sm:$0xff]
    %v157 = vld [vmem:[#allocation2 + $0x2f8] sm:$0xff]
    %v158 = vld [vmem:[#allocation2 + $0x300] sm:$0xff]
    %v159 = vld [vmem:[#allocation2 + $0x308] sm:$0xff]
    %v160 = vld [vmem:[#allocation2 + $0x310] sm:$0xff]
    %v161 = vld [vmem:[#allocation2 + $0x318] sm:$0xff]
    %v162 = vld [vmem:[#allocation2 + $0x320] sm:$0xff]
    %v163 = vld [vmem:[#allocation2 + $0x328] sm:$0xff]
    %v164 = vld [vmem:[#allocation2 + $0x330] sm:$0xff]
    %v165 = vld [vmem:[#allocation2 + $0x338] sm:$0xff]
    %v166 = vld [vmem:[#allocation2 + $0x340] sm:$0xff]
    %v167 = vld [vmem:[#allocation2 + $0x348] sm:$0xff]
    %v168 = vld [vmem:[#allocation2 + $0x350] sm:$0xff]
    %v169 = vld [vmem:[#allocation2 + $0x358] sm:$0xff]
    %v170 = vld [vmem:[#allocation2 + $0x360] sm:$0xff]
    %v171 = vld [vmem:[#allocation2 + $0x368] sm:$0xff]
    %v172 = vld [vmem:[#allocation2 + $0x370] sm:$0xff]
    %v173 = vld [vmem:[#allocation2 + $0x378] sm:$0xff]
    %v174 = vld [vmem:[#allocation2 + $0x380] sm:$0xff]
    %v175 = vld [vmem:[#allocation2 + $0x388] sm:$0xff]
    %v176 = vld [vmem:[#allocation2 + $0x390] sm:$0xff]
    %v177 = vld [vmem:[#allocation2 + $0x398] sm:$0xff]
    %v178 = vld [vmem:[#allocation2 + $0x3a0] sm:$0xff]
    %v179 = vld [vmem:[#allocation2 + $0x3a8] sm:$0xff]
    %v180 = vld [vmem:[#allocation2 + $0x3b0] sm:$0xff]
    %v181 = vld [vmem:[#allocation2 + $0x3b8] sm:$0xff]
    %v182 = vld [vmem:[#allocation2 + $0x3c0] sm:$0xff]
    %v183 = vld [vmem:[#allocation2 + $0x3c8] sm:$0xff]
    %v184 = vld [vmem:[#allocation2 + $0x3d0] sm:$0xff]
    %v185 = vld [vmem:[#allocation2 + $0x3d8] sm:$0xff]
    %v186 = vld [vmem:[#allocation2 + $0x3e0] sm:$0xff]
    %v187 = vld [vmem:[#allocation2 + $0x3e8] sm:$0xff]
    %v188 = vld [vmem:[#allocation2 + $0x3f0] sm:$0xff]
    %v189 = vld [vmem:[#allocation2 + $0x3f8] sm:$0xff]
    %v190 = vld [vmem:[#allocation2 + $0x400] sm:$0xff]
    %v191 = vld [vmem:[#allocation2 + $0x408] sm:$0xff]
    %v192 = vld [vmem:[#allocation2 + $0x410] sm:$0xff]
    %v193 = vld [vmem:[#allocation2 + $0x418] sm:$0xff]
    %v194 = vld [vmem:[#allocation2 + $0x420] sm:$0xff]
    %v195 = vld [vmem:[#allocation2 + $0x428] sm:$0xff]
    %v196 = vld [vmem:[#allocation2 + $0x430] sm:$0xff]
    %v197 = vld [vmem:[#allocation2 + $0x438] sm:$0xff]
    %v198 = vld [vmem:[#allocation2 + $0x440] sm:$0xff]
    %v199 = vld [vmem:[#allocation2 + $0x448] sm:$0xff]
    %v200 = vld [vmem:[#allocation2 + $0x450] sm:$0xff]
    %v201 = vld [vmem:[#allocation2 + $0x458] sm:$0xff]
    %v202 = vld [vmem:[#allocation2 + $0x460] sm:$0xff]
    %v203 = vld [vmem:[#allocation2 + $0x468] sm:$0xff]
    %v204 = vld [vmem:[#allocation2 + $0x470] sm:$0xff]
    %v205 = vld [vmem:[#allocation2 + $0x478] sm:$0xff]
    %v206 = vld [vmem:[#allocation2 + $0x480] sm:$0xff]
    %v207 = vld [vmem:[#allocation2 + $0x488] sm:$0xff]
    %v208 = vld [vmem:[#allocation2 + $0x490] sm:$0xff]
    %v209 = vld [vmem:[#allocation2 + $0x498] sm:$0xff]
    %v210 = vld [vmem:[#allocation2 + $0x4a0] sm:$0xff]
    %v211 = vld [vmem:[#allocation2 + $0x4a8] sm:$0xff]
    %v212 = vld [vmem:[#allocation2 + $0x4b0] sm:$0xff]
    %v213 = vld [vmem:[#allocation2 + $0x4b8] sm:$0xff]
    %v214 = vld [vmem:[#allocation2 + $0x4c0] sm:$0xff]
    %v215 = vld [vmem:[#allocation2 + $0x4c8] sm:$0xff]
    %v216 = vld [vmem:[#allocation2 + $0x4d0] sm:$0xff]
    %v217 = vld [vmem:[#allocation2 + $0x4d8] sm:$0xff]
    %v218 = vld [vmem:[#allocation2 + $0x4e0] sm:$0xff]
    %v219 = vld [vmem:[#allocation2 + $0x4e8] sm:$0xff]
    %v220 = vld [vmem:[#allocation2 + $0x4f0] sm:$0xff]
    %v221 = vld [vmem:[#allocation2 + $0x4f8] sm:$0xff]
    %v222 = vld [vmem:[#allocation2 + $0x500] sm:$0xff]
    %v223 = vld [vmem:[#allocation2 + $0x508] sm:$0xff]
    %v224 = vld [vmem:[#allocation2 + $0x510] sm:$0xff]
    %v225 = vld [vmem:[#allocation2 + $0x518] sm:$0xff]
    %v226 = vld [vmem:[#allocation2 + $0x520] sm:$0xff]
    %v227 = vld [vmem:[#allocation2 + $0x528] sm:$0xff]
    %v228 = vld [vmem:[#allocation2 + $0x530] sm:$0xff]
    %v229 = vld [vmem:[#allocation2 + $0x538] sm:$0xff]
    %v230 = vld [vmem:[#allocation2 + $0x540] sm:$0xff]
    %v231 = vld [vmem:[#allocation2 + $0x548] sm:$0xff]
    %v232 = vld [vmem:[#allocation2 + $0x550] sm:$0xff]
    %v233 = vld [vmem:[#allocation2 + $0x558] sm:$0xff]
    %v234 = vld [vmem:[#allocation2 + $0x560] sm:$0xff]
    %v235 = vld [vmem:[#allocation2 + $0x568] sm:$0xff]
    %v236 = vld [vmem:[#allocation2 + $0x570] sm:$0xff]
    %v237 = vld [vmem:[#allocation2 + $0x578] sm:$0xff]
    %v238 = vld [vmem:[#allocation2 + $0x580] sm:$0xff]
    %v239 = vld [vmem:[#allocation2 + $0x588] sm:$0xff]
    %v240 = vld [vmem:[#allocation2 + $0x590] sm:$0xff]
    %v241 = vld [vmem:[#allocation2 + $0x598] sm:$0xff]
    %v242 = vld [vmem:[#allocation2 + $0x5a0] sm:$0xff]
    %v243 = vld [vmem:[#allocation2 + $0x5a8] sm:$0xff]
    %v244 = vld [vmem:[#allocation2 + $0x5b0] sm:$0xff]
    %v245 = vld [vmem:[#allocation2 + $0x5b8] sm:$0xff]
    %v246 = vld [vmem:[#allocation2 + $0x5c0] sm:$0xff]
    %v247 = vld [vmem:[#allocation2 + $0x5c8] sm:$0xff]
    %v248 = vld [vmem:[#allocation2 + $0x5d0] sm:$0xff]
    %v249 = vld [vmem:[#allocation2 + $0x5d8] sm:$0xff]
    %v250 = vld [vmem:[#allocation2 + $0x5e0] sm:$0xff]
    %v251 = vld [vmem:[#allocation2 + $0x5e8] sm:$0xff]
    %v252 = vld [vmem:[#allocation2 + $0x5f0] sm:$0xff]
    %v253 = vld [vmem:[#allocation2 + $0x5f8] sm:$0xff]
    %v254 = vld [vmem:[#allocation2 + $0x600] sm:$0xff]
    %v255 = vld [vmem:[#allocation2 + $0x608] sm:$0xff]
    %v256 = vld [vmem:[#allocation2 + $0x610] sm:$0xff]
    %v257 = vld [vmem:[#allocation2 + $0x618] sm:$0xff]
    %v258 = vld [vmem:[#allocation2 + $0x620] sm:$0xff]
    %v259 = vld [vmem:[#allocation2 + $0x628] sm:$0xff]
    %v260 = vld [vmem:[#allocation2 + $0x630] sm:$0xff]
    %v261 = vld [vmem:[#allocation2 + $0x638] sm:$0xff]
    %v262 = vld [vmem:[#allocation2 + $0x640] sm:$0xff]
    %v263 = vld [vmem:[#allocation2 + $0x648] sm:$0xff]
    %v264 = vld [vmem:[#allocation2 + $0x650] sm:$0xff]
    %v265 = vld [vmem:[#allocation2 + $0x658] sm:$0xff]
    %v266 = vld [vmem:[#allocation2 + $0x660] sm:$0xff]
    %v267 = vld [vmem:[#allocation2 + $0x668] sm:$0xff]
    %v268 = vld [vmem:[#allocation2 + $0x670] sm:$0xff]
    %v269 = vld [vmem:[#allocation2 + $0x678] sm:$0xff]
    %v270 = vld [vmem:[#allocation2 + $0x680] sm:$0xff]
    %v271 = vld [vmem:[#allocation2 + $0x688] sm:$0xff]
    %v272 = vld [vmem:[#allocation2 + $0x690] sm:$0xff]
    %v273 = vld [vmem:[#allocation2 + $0x698] sm:$0xff]
    %v274 = vld [vmem:[#allocation2 + $0x6a0] sm:$0xff]
    %v275 = vld [vmem:[#allocation2 + $0x6a8] sm:$0xff]
    %v276 = vld [vmem:[#allocation2 + $0x6b0] sm:$0xff]
    %v277 = vld [vmem:[#allocation2 + $0x6b8] sm:$0xff]
    %v278 = vld [vmem:[#allocation2 + $0x6c0] sm:$0xff]
    %v279 = vld [vmem:[#allocation2 + $0x6c8] sm:$0xff]
    %v280 = vld [vmem:[#allocation2 + $0x6d0] sm:$0xff]
    %v281 = vld [vmem:[#allocation2 + $0x6d8] sm:$0xff]
    %v282 = vld [vmem:[#allocation2 + $0x6e0] sm:$0xff]
    %v283 = vld [vmem:[#allocation2 + $0x6e8] sm:$0xff]
    %v284 = vld [vmem:[#allocation2 + $0x6f0] sm:$0xff]
    %v285 = vld [vmem:[#allocation2 + $0x6f8] sm:$0xff]
    %v286 = vld [vmem:[#allocation2 + $0x700] sm:$0xff]
    %v287 = vld [vmem:[#allocation2 + $0x708] sm:$0xff]
    %v288 = vld [vmem:[#allocation2 + $0x710] sm:$0xff]
    %v289 = vld [vmem:[#allocation2 + $0x718] sm:$0xff]
    %v290 = vld [vmem:[#allocation2 + $0x720] sm:$0xff]
    %v291 = vld [vmem:[#allocation2 + $0x728] sm:$0xff]
    %v292 = vld [vmem:[#allocation2 + $0x730] sm:$0xff]
    %v293 = vld [vmem:[#allocation2 + $0x738] sm:$0xff]
    %v294 = vld [vmem:[#allocation2 + $0x740] sm:$0xff]
    %v295 = vld [vmem:[#allocation2 + $0x748] sm:$0xff]
    %v296 = vld [vmem:[#allocation2 + $0x750] sm:$0xff]
    %v297 = vld [vmem:[#allocation2 + $0x758] sm:$0xff]
    %v298 = vld [vmem:[#allocation2 + $0x760] sm:$0xff]
    %v299 = vld [vmem:[#allocation2 + $0x768] sm:$0xff]
    %v300 = vld [vmem:[#allocation2 + $0x770] sm:$0xff]
    %v301 = vld [vmem:[#allocation2 + $0x778] sm:$0xff]
    %v302 = vld [vmem:[#allocation2 + $0x780] sm:$0xff]
    %v303 = vld [vmem:[#allocation2 + $0x788] sm:$0xff]
    %v304 = vld [vmem:[#allocation2 + $0x790] sm:$0xff]
    %v305 = vld [vmem:[#allocation2 + $0x798] sm:$0xff]
    %v306 = vld [vmem:[#allocation2 + $0x7a0] sm:$0xff]
    %v307 = vld [vmem:[#allocation2 + $0x7a8] sm:$0xff]
    %v308 = vld [vmem:[#allocation2 + $0x7b0] sm:$0xff]
    %v309 = vld [vmem:[#allocation2 + $0x7b8] sm:$0xff]
    %v310 = vld [vmem:[#allocation2 + $0x7c0] sm:$0xff]
    %v311 = vld [vmem:[#allocation2 + $0x7c8] sm:$0xff]
    %v312 = vld [vmem:[#allocation2 + $0x7d0] sm:$0xff]
    %v313 = vld [vmem:[#allocation2 + $0x7d8] sm:$0xff]
    %v314 = vld [vmem:[#allocation2 + $0x7e0] sm:$0xff]
    %v315 = vld [vmem:[#allocation2 + $0x7e8] sm:$0xff]
    %v316 = vld [vmem:[#allocation2 + $0x7f0] sm:$0xff]
    %v317 = vld [vmem:[#allocation2 + $0x7f8] sm:$0xff]
    %v322 = vunpack.c.l.b16 %v58
    %v323 = vunpack.c.h.b16 %v58
    %v324 = vunpack.c.l.b16 %v59
    %v325 = vunpack.c.h.b16 %v59
    %v326 = vunpack.c.l.b16 %v60
    %v327 = vunpack.c.h.b16 %v60
    %v328 = vunpack.c.l.b16 %v61
    %v329 = vunpack.c.h.b16 %v61
    %v330 = vpack.c.b16 %v322, %v322
    %v331 = vpack.c.b16 %v323, %v323
    %v332 = vpack.c.b16 %v324, %v324
    %v333 = vpack.c.b16 %v325, %v325
    %v334 = vpack.c.b16 %v326, %v326
    %v335 = vpack.c.b16 %v327, %v327
    %v336 = vpack.c.b16 %v328, %v328
    %v337 = vpack.c.b16 %v329, %v329
    %v602 = vunpack.c.l.b16 %v62
    %v603 = vunpack.c.h.b16 %v62
    %v604 = vunpack.c.l.b16 %v63
    %v605 = vunpack.c.h.b16 %v63
    %v606 = vunpack.c.l.b16 %v64
    %v607 = vunpack.c.h.b16 %v64
    %v608 = vunpack.c.l.b16 %v65
    %v609 = vunpack.c.h.b16 %v65
    %v610 = vunpack.c.l.b16 %v66
    %v611 = vunpack.c.h.b16 %v66
    %v612 = vunpack.c.l.b16 %v67
    %v613 = vunpack.c.h.b16 %v67
    %v614 = vunpack.c.l.b16 %v68
    %v615 = vunpack.c.h.b16 %v68
    %v616 = vunpack.c.l.b16 %v69
    %v617 = vunpack.c.h.b16 %v69
    %v618 = vunpack.c.l.b16 %v70
    %v619 = vunpack.c.h.b16 %v70
    %v620 = vunpack.c.l.b16 %v71
    %v621 = vunpack.c.h.b16 %v71
    %v622 = vunpack.c.l.b16 %v72
    %v623 = vunpack.c.h.b16 %v72
    %v624 = vunpack.c.l.b16 %v73
    %v625 = vunpack.c.h.b16 %v73
    %v626 = vunpack.c.l.b16 %v74
    %v627 = vunpack.c.h.b16 %v74
    %v628 = vunpack.c.l.b16 %v75
    %v629 = vunpack.c.h.b16 %v75
    %v630 = vunpack.c.l.b16 %v76
    %v631 = vunpack.c.h.b16 %v76
    %v632 = vunpack.c.l.b16 %v77
    %v633 = vunpack.c.h.b16 %v77
    %v634 = vunpack.c.l.b16 %v78
    %v635 = vunpack.c.h.b16 %v78
    %v636 = vunpack.c.l.b16 %v79
    %v637 = vunpack.c.h.b16 %v79
    %v638 = vunpack.c.l.b16 %v80
    %v639 = vunpack.c.h.b16 %v80
    %v640 = vunpack.c.l.b16 %v81
    %v641 = vunpack.c.h.b16 %v81
    %v642 = vunpack.c.l.b16 %v82
    %v643 = vunpack.c.h.b16 %v82
    %v644 = vunpack.c.l.b16 %v83
    %v645 = vunpack.c.h.b16 %v83
    %v646 = vunpack.c.l.b16 %v84
    %v647 = vunpack.c.h.b16 %v84
    %v648 = vunpack.c.l.b16 %v85
    %v649 = vunpack.c.h.b16 %v85
    %v650 = vunpack.c.l.b16 %v86
    %v651 = vunpack.c.h.b16 %v86
    %v652 = vunpack.c.l.b16 %v87
    %v653 = vunpack.c.h.b16 %v87
    %v654 = vunpack.c.l.b16 %v88
    %v655 = vunpack.c.h.b16 %v88
    %v656 = vunpack.c.l.b16 %v89
    %v657 = vunpack.c.h.b16 %v89
    %v658 = vunpack.c.l.b16 %v90
    %v659 = vunpack.c.h.b16 %v90
    %v660 = vunpack.c.l.b16 %v91
    %v661 = vunpack.c.h.b16 %v91
    %v662 = vunpack.c.l.b16 %v92
    %v663 = vunpack.c.h.b16 %v92
    %v664 = vunpack.c.l.b16 %v93
    %v665 = vunpack.c.h.b16 %v93
    %v666 = vunpack.c.l.b16 %v94
    %v667 = vunpack.c.h.b16 %v94
    %v668 = vunpack.c.l.b16 %v95
    %v669 = vunpack.c.h.b16 %v95
    %v670 = vunpack.c.l.b16 %v96
    %v671 = vunpack.c.h.b16 %v96
    %v672 = vunpack.c.l.b16 %v97
    %v673 = vunpack.c.h.b16 %v97
    %v674 = vunpack.c.l.b16 %v98
    %v675 = vunpack.c.h.b16 %v98
    %v676 = vunpack.c.l.b16 %v99
    %v677 = vunpack.c.h.b16 %v99
    %v678 = vunpack.c.l.b16 %v100
    %v679 = vunpack.c.h.b16 %v100
    %v680 = vunpack.c.l.b16 %v101
    %v681 = vunpack.c.h.b16 %v101
    %v682 = vunpack.c.l.b16 %v102
    %v683 = vunpack.c.h.b16 %v102
    %v684 = vunpack.c.l.b16 %v103
    %v685 = vunpack.c.h.b16 %v103
    %v686 = vunpack.c.l.b16 %v104
    %v687 = vunpack.c.h.b16 %v104
    %v688 = vunpack.c.l.b16 %v105
    %v689 = vunpack.c.h.b16 %v105
    %v690 = vunpack.c.l.b16 %v106
    %v691 = vunpack.c.h.b16 %v106
    %v692 = vunpack.c.l.b16 %v107
    %v693 = vunpack.c.h.b16 %v107
    %v694 = vunpack.c.l.b16 %v108
    %v695 = vunpack.c.h.b16 %v108
    %v696 = vunpack.c.l.b16 %v109
    %v697 = vunpack.c.h.b16 %v109
    %v698 = vunpack.c.l.b16 %v110
    %v699 = vunpack.c.h.b16 %v110
    %v700 = vunpack.c.l.b16 %v111
    %v701 = vunpack.c.h.b16 %v111
    %v702 = vunpack.c.l.b16 %v112
    %v703 = vunpack.c.h.b16 %v112
    %v704 = vunpack.c.l.b16 %v113
    %v705 = vunpack.c.h.b16 %v113
    %v706 = vunpack.c.l.b16 %v114
    %v707 = vunpack.c.h.b16 %v114
    %v708 = vunpack.c.l.b16 %v115
    %v709 = vunpack.c.h.b16 %v115
    %v710 = vunpack.c.l.b16 %v116
    %v711 = vunpack.c.h.b16 %v116
    %v712 = vunpack.c.l.b16 %v117
    %v713 = vunpack.c.h.b16 %v117
    %v714 = vunpack.c.l.b16 %v118
    %v715 = vunpack.c.h.b16 %v118
    %v716 = vunpack.c.l.b16 %v119
    %v717 = vunpack.c.h.b16 %v119
    %v718 = vunpack.c.l.b16 %v120
    %v719 = vunpack.c.h.b16 %v120
    %v720 = vunpack.c.l.b16 %v121
    %v721 = vunpack.c.h.b16 %v121
    %v722 = vunpack.c.l.b16 %v122
    %v723 = vunpack.c.h.b16 %v122
    %v724 = vunpack.c.l.b16 %v123
    %v725 = vunpack.c.h.b16 %v123
    %v726 = vunpack.c.l.b16 %v124
    %v727 = vunpack.c.h.b16 %v124
    %v728 = vunpack.c.l.b16 %v125
    %v729 = vunpack.c.h.b16 %v125
    %v730 = vunpack.c.l.b16 %v126
    %v731 = vunpack.c.h.b16 %v126
    %v732 = vunpack.c.l.b16 %v127
    %v733 = vunpack.c.h.b16 %v127
    %v734 = vunpack.c.l.b16 %v128
    %v735 = vunpack.c.h.b16 %v128
    %v736 = vunpack.c.l.b16 %v129
    %v737 = vunpack.c.h.b16 %v129
    %v738 = vunpack.c.l.b16 %v130
    %v739 = vunpack.c.h.b16 %v130
    %v740 = vunpack.c.l.b16 %v131
    %v741 = vunpack.c.h.b16 %v131
    %v742 = vunpack.c.l.b16 %v132
    %v743 = vunpack.c.h.b16 %v132
    %v744 = vunpack.c.l.b16 %v133
    %v745 = vunpack.c.h.b16 %v133
    %v746 = vunpack.c.l.b16 %v134
    %v747 = vunpack.c.h.b16 %v134
    %v748 = vunpack.c.l.b16 %v135
    %v749 = vunpack.c.h.b16 %v135
    %v750 = vunpack.c.l.b16 %v136
    %v751 = vunpack.c.h.b16 %v136
    %v752 = vunpack.c.l.b16 %v137
    %v753 = vunpack.c.h.b16 %v137
    %v754 = vunpack.c.l.b16 %v138
    %v755 = vunpack.c.h.b16 %v138
    %v756 = vunpack.c.l.b16 %v139
    %v757 = vunpack.c.h.b16 %v139
    %v758 = vunpack.c.l.b16 %v140
    %v759 = vunpack.c.h.b16 %v140
    %v760 = vunpack.c.l.b16 %v141
    %v761 = vunpack.c.h.b16 %v141
    %v762 = vunpack.c.l.b16 %v142
    %v763 = vunpack.c.h.b16 %v142
    %v764 = vunpack.c.l.b16 %v143
    %v765 = vunpack.c.h.b16 %v143
    %v766 = vunpack.c.l.b16 %v144
    %v767 = vunpack.c.h.b16 %v144
    %v768 = vunpack.c.l.b16 %v145
    %v769 = vunpack.c.h.b16 %v145
    %v770 = vunpack.c.l.b16 %v146
    %v771 = vunpack.c.h.b16 %v146
    %v772 = vunpack.c.l.b16 %v147
    %v773 = vunpack.c.h.b16 %v147
    %v774 = vunpack.c.l.b16 %v148
    %v775 = vunpack.c.h.b16 %v148
    %v776 = vunpack.c.l.b16 %v149
    %v777 = vunpack.c.h.b16 %v149
    %v778 = vunpack.c.l.b16 %v150
    %v779 = vunpack.c.h.b16 %v150
    %v780 = vunpack.c.l.b16 %v151
    %v781 = vunpack.c.h.b16 %v151
    %v782 = vunpack.c.l.b16 %v152
    %v783 = vunpack.c.h.b16 %v152
    %v784 = vunpack.c.l.b16 %v153
    %v785 = vunpack.c.h.b16 %v153
    %v786 = vunpack.c.l.b16 %v154
    %v787 = vunpack.c.h.b16 %v154
    %v788 = vunpack.c.l.b16 %v155
    %v789 = vunpack.c.h.b16 %v155
    %v790 = vunpack.c.l.b16 %v156
    %v791 = vunpack.c.h.b16 %v156
    %v792 = vunpack.c.l.b16 %v157
    %v793 = vunpack.c.h.b16 %v157
    %v794 = vunpack.c.l.b16 %v158
    %v795 = vunpack.c.h.b16 %v158
    %v796 = vunpack.c.l.b16 %v159
    %v797 = vunpack.c.h.b16 %v159
    %v798 = vunpack.c.l.b16 %v160
    %v799 = vunpack.c.h.b16 %v160
    %v800 = vunpack.c.l.b16 %v161
    %v801 = vunpack.c.h.b16 %v161
    %v802 = vunpack.c.l.b16 %v162
    %v803 = vunpack.c.h.b16 %v162
    %v804 = vunpack.c.l.b16 %v163
    %v805 = vunpack.c.h.b16 %v163
    %v806 = vunpack.c.l.b16 %v164
    %v807 = vunpack.c.h.b16 %v164
    %v808 = vunpack.c.l.b16 %v165
    %v809 = vunpack.c.h.b16 %v165
    %v810 = vunpack.c.l.b16 %v166
    %v811 = vunpack.c.h.b16 %v166
    %v812 = vunpack.c.l.b16 %v167
    %v813 = vunpack.c.h.b16 %v167
    %v814 = vunpack.c.l.b16 %v168
    %v815 = vunpack.c.h.b16 %v168
    %v816 = vunpack.c.l.b16 %v169
    %v817 = vunpack.c.h.b16 %v169
    %v818 = vunpack.c.l.b16 %v170
    %v819 = vunpack.c.h.b16 %v170
    %v820 = vunpack.c.l.b16 %v171
    %v821 = vunpack.c.h.b16 %v171
    %v822 = vunpack.c.l.b16 %v172
    %v823 = vunpack.c.h.b16 %v172
    %v824 = vunpack.c.l.b16 %v173
    %v825 = vunpack.c.h.b16 %v173
    %v826 = vunpack.c.l.b16 %v174
    %v827 = vunpack.c.h.b16 %v174
    %v828 = vunpack.c.l.b16 %v175
    %v829 = vunpack.c.h.b16 %v175
    %v830 = vunpack.c.l.b16 %v176
    %v831 = vunpack.c.h.b16 %v176
    %v832 = vunpack.c.l.b16 %v177
    %v833 = vunpack.c.h.b16 %v177
    %v834 = vunpack.c.l.b16 %v178
    %v835 = vunpack.c.h.b16 %v178
    %v836 = vunpack.c.l.b16 %v179
    %v837 = vunpack.c.h.b16 %v179
    %v838 = vunpack.c.l.b16 %v180
    %v839 = vunpack.c.h.b16 %v180
    %v840 = vunpack.c.l.b16 %v181
    %v841 = vunpack.c.h.b16 %v181
    %v842 = vunpack.c.l.b16 %v182
    %v843 = vunpack.c.h.b16 %v182
    %v844 = vunpack.c.l.b16 %v183
    %v845 = vunpack.c.h.b16 %v183
    %v846 = vunpack.c.l.b16 %v184
    %v847 = vunpack.c.h.b16 %v184
    %v848 = vunpack.c.l.b16 %v185
    %v849 = vunpack.c.h.b16 %v185
    %v850 = vunpack.c.l.b16 %v186
    %v851 = vunpack.c.h.b16 %v186
    %v852 = vunpack.c.l.b16 %v187
    %v853 = vunpack.c.h.b16 %v187
    %v854 = vunpack.c.l.b16 %v188
    %v855 = vunpack.c.h.b16 %v188
    %v856 = vunpack.c.l.b16 %v189
    %v857 = vunpack.c.h.b16 %v189
    %v858 = vunpack.c.l.b16 %v190
    %v859 = vunpack.c.h.b16 %v190
    %v860 = vunpack.c.l.b16 %v191
    %v861 = vunpack.c.h.b16 %v191
    %v862 = vunpack.c.l.b16 %v192
    %v863 = vunpack.c.h.b16 %v192
    %v864 = vunpack.c.l.b16 %v193
    %v865 = vunpack.c.h.b16 %v193
    %v866 = vunpack.c.l.b16 %v194
    %v867 = vunpack.c.h.b16 %v194
    %v868 = vunpack.c.l.b16 %v195
    %v869 = vunpack.c.h.b16 %v195
    %v870 = vunpack.c.l.b16 %v196
    %v871 = vunpack.c.h.b16 %v196
    %v872 = vunpack.c.l.b16 %v197
    %v873 = vunpack.c.h.b16 %v197
    %v874 = vunpack.c.l.b16 %v198
    %v875 = vunpack.c.h.b16 %v198
    %v876 = vunpack.c.l.b16 %v199
    %v877 = vunpack.c.h.b16 %v199
    %v878 = vunpack.c.l.b16 %v200
    %v879 = vunpack.c.h.b16 %v200
    %v880 = vunpack.c.l.b16 %v201
    %v881 = vunpack.c.h.b16 %v201
    %v882 = vunpack.c.l.b16 %v202
    %v883 = vunpack.c.h.b16 %v202
    %v884 = vunpack.c.l.b16 %v203
    %v885 = vunpack.c.h.b16 %v203
    %v886 = vunpack.c.l.b16 %v204
    %v887 = vunpack.c.h.b16 %v204
    %v888 = vunpack.c.l.b16 %v205
    %v889 = vunpack.c.h.b16 %v205
    %v890 = vunpack.c.l.b16 %v206
    %v891 = vunpack.c.h.b16 %v206
    %v892 = vunpack.c.l.b16 %v207
    %v893 = vunpack.c.h.b16 %v207
    %v894 = vunpack.c.l.b16 %v208
    %v895 = vunpack.c.h.b16 %v208
    %v896 = vunpack.c.l.b16 %v209
    %v897 = vunpack.c.h.b16 %v209
    %v898 = vunpack.c.l.b16 %v210
    %v899 = vunpack.c.h.b16 %v210
    %v900 = vunpack.c.l.b16 %v211
    %v901 = vunpack.c.h.b16 %v211
    %v902 = vunpack.c.l.b16 %v212
    %v903 = vunpack.c.h.b16 %v212
    %v904 = vunpack.c.l.b16 %v213
    %v905 = vunpack.c.h.b16 %v213
    %v906 = vunpack.c.l.b16 %v214
    %v907 = vunpack.c.h.b16 %v214
    %v908 = vunpack.c.l.b16 %v215
    %v909 = vunpack.c.h.b16 %v215
    %v910 = vunpack.c.l.b16 %v216
    %v911 = vunpack.c.h.b16 %v216
    %v912 = vunpack.c.l.b16 %v217
    %v913 = vunpack.c.h.b16 %v217
    %v914 = vunpack.c.l.b16 %v218
    %v915 = vunpack.c.h.b16 %v218
    %v916 = vunpack.c.l.b16 %v219
    %v917 = vunpack.c.h.b16 %v219
    %v918 = vunpack.c.l.b16 %v220
    %v919 = vunpack.c.h.b16 %v220
    %v920 = vunpack.c.l.b16 %v221
    %v921 = vunpack.c.h.b16 %v221
    %v922 = vunpack.c.l.b16 %v222
    %v923 = vunpack.c.h.b16 %v222
    %v924 = vunpack.c.l.b16 %v223
    %v925 = vunpack.c.h.b16 %v223
    %v926 = vunpack.c.l.b16 %v224
    %v927 = vunpack.c.h.b16 %v224
    %v928 = vunpack.c.l.b16 %v225
    %v929 = vunpack.c.h.b16 %v225
    %v930 = vunpack.c.l.b16 %v226
    %v931 = vunpack.c.h.b16 %v226
    %v932 = vunpack.c.l.b16 %v227
    %v933 = vunpack.c.h.b16 %v227
    %v934 = vunpack.c.l.b16 %v228
    %v935 = vunpack.c.h.b16 %v228
    %v936 = vunpack.c.l.b16 %v229
    %v937 = vunpack.c.h.b16 %v229
    %v938 = vunpack.c.l.b16 %v230
    %v939 = vunpack.c.h.b16 %v230
    %v940 = vunpack.c.l.b16 %v231
    %v941 = vunpack.c.h.b16 %v231
    %v942 = vunpack.c.l.b16 %v232
    %v943 = vunpack.c.h.b16 %v232
    %v944 = vunpack.c.l.b16 %v233
    %v945 = vunpack.c.h.b16 %v233
    %v946 = vunpack.c.l.b16 %v234
    %v947 = vunpack.c.h.b16 %v234
    %v948 = vunpack.c.l.b16 %v235
    %v949 = vunpack.c.h.b16 %v235
    %v950 = vunpack.c.l.b16 %v236
    %v951 = vunpack.c.h.b16 %v236
    %v952 = vunpack.c.l.b16 %v237
    %v953 = vunpack.c.h.b16 %v237
    %v954 = vunpack.c.l.b16 %v238
    %v955 = vunpack.c.h.b16 %v238
    %v956 = vunpack.c.l.b16 %v239
    %v957 = vunpack.c.h.b16 %v239
    %v958 = vunpack.c.l.b16 %v240
    %v959 = vunpack.c.h.b16 %v240
    %v960 = vunpack.c.l.b16 %v241
    %v961 = vunpack.c.h.b16 %v241
    %v962 = vunpack.c.l.b16 %v242
    %v963 = vunpack.c.h.b16 %v242
    %v964 = vunpack.c.l.b16 %v243
    %v965 = vunpack.c.h.b16 %v243
    %v966 = vunpack.c.l.b16 %v244
    %v967 = vunpack.c.h.b16 %v244
    %v968 = vunpack.c.l.b16 %v245
    %v969 = vunpack.c.h.b16 %v245
    %v970 = vunpack.c.l.b16 %v246
    %v971 = vunpack.c.h.b16 %v246
    %v972 = vunpack.c.l.b16 %v247
    %v973 = vunpack.c.h.b16 %v247
    %v974 = vunpack.c.l.b16 %v248
    %v975 = vunpack.c.h.b16 %v248
    %v976 = vunpack.c.l.b16 %v249
    %v977 = vunpack.c.h.b16 %v249
    %v978 = vunpack.c.l.b16 %v250
    %v979 = vunpack.c.h.b16 %v250
    %v980 = vunpack.c.l.b16 %v251
    %v981 = vunpack.c.h.b16 %v251
    %v982 = vunpack.c.l.b16 %v252
    %v983 = vunpack.c.h.b16 %v252
    %v984 = vunpack.c.l.b16 %v253
    %v985 = vunpack.c.h.b16 %v253
    %v986 = vunpack.c.l.b16 %v254
    %v987 = vunpack.c.h.b16 %v254
    %v988 = vunpack.c.l.b16 %v255
    %v989 = vunpack.c.h.b16 %v255
    %v990 = vunpack.c.l.b16 %v256
    %v991 = vunpack.c.h.b16 %v256
    %v992 = vunpack.c.l.b16 %v257
    %v993 = vunpack.c.h.b16 %v257
    %v994 = vunpack.c.l.b16 %v258
    %v995 = vunpack.c.h.b16 %v258
    %v996 = vunpack.c.l.b16 %v259
    %v997 = vunpack.c.h.b16 %v259
    %v998 = vunpack.c.l.b16 %v260
    %v999 = vunpack.c.h.b16 %v260
    %v1000 = vunpack.c.l.b16 %v261
    %v1001 = vunpack.c.h.b16 %v261
    %v1002 = vunpack.c.l.b16 %v262
    %v1003 = vunpack.c.h.b16 %v262
    %v1004 = vunpack.c.l.b16 %v263
    %v1005 = vunpack.c.h.b16 %v263
    %v1006 = vunpack.c.l.b16 %v264
    %v1007 = vunpack.c.h.b16 %v264
    %v1008 = vunpack.c.l.b16 %v265
    %v1009 = vunpack.c.h.b16 %v265
    %v1010 = vunpack.c.l.b16 %v266
    %v1011 = vunpack.c.h.b16 %v266
    %v1012 = vunpack.c.l.b16 %v267
    %v1013 = vunpack.c.h.b16 %v267
    %v1014 = vunpack.c.l.b16 %v268
    %v1015 = vunpack.c.h.b16 %v268
    %v1016 = vunpack.c.l.b16 %v269
    %v1017 = vunpack.c.h.b16 %v269
    %v1018 = vunpack.c.l.b16 %v270
    %v1019 = vunpack.c.h.b16 %v270
    %v1020 = vunpack.c.l.b16 %v271
    %v1021 = vunpack.c.h.b16 %v271
    %v1022 = vunpack.c.l.b16 %v272
    %v1023 = vunpack.c.h.b16 %v272
    %v1024 = vunpack.c.l.b16 %v273
    %v1025 = vunpack.c.h.b16 %v273
    %v1026 = vunpack.c.l.b16 %v274
    %v1027 = vunpack.c.h.b16 %v274
    %v1028 = vunpack.c.l.b16 %v275
    %v1029 = vunpack.c.h.b16 %v275
    %v1030 = vunpack.c.l.b16 %v276
    %v1031 = vunpack.c.h.b16 %v276
    %v1032 = vunpack.c.l.b16 %v277
    %v1033 = vunpack.c.h.b16 %v277
    %v1034 = vunpack.c.l.b16 %v278
    %v1035 = vunpack.c.h.b16 %v278
    %v1036 = vunpack.c.l.b16 %v279
    %v1037 = vunpack.c.h.b16 %v279
    %v1038 = vunpack.c.l.b16 %v280
    %v1039 = vunpack.c.h.b16 %v280
    %v1040 = vunpack.c.l.b16 %v281
    %v1041 = vunpack.c.h.b16 %v281
    %v1042 = vunpack.c.l.b16 %v282
    %v1043 = vunpack.c.h.b16 %v282
    %v1044 = vunpack.c.l.b16 %v283
    %v1045 = vunpack.c.h.b16 %v283
    %v1046 = vunpack.c.l.b16 %v284
    %v1047 = vunpack.c.h.b16 %v284
    %v1048 = vunpack.c.l.b16 %v285
    %v1049 = vunpack.c.h.b16 %v285
    %v1050 = vunpack.c.l.b16 %v286
    %v1051 = vunpack.c.h.b16 %v286
    %v1052 = vunpack.c.l.b16 %v287
    %v1053 = vunpack.c.h.b16 %v287
    %v1054 = vunpack.c.l.b16 %v288
    %v1055 = vunpack.c.h.b16 %v288
    %v1056 = vunpack.c.l.b16 %v289
    %v1057 = vunpack.c.h.b16 %v289
    %v1058 = vunpack.c.l.b16 %v290
    %v1059 = vunpack.c.h.b16 %v290
    %v1060 = vunpack.c.l.b16 %v291
    %v1061 = vunpack.c.h.b16 %v291
    %v1062 = vunpack.c.l.b16 %v292
    %v1063 = vunpack.c.h.b16 %v292
    %v1064 = vunpack.c.l.b16 %v293
    %v1065 = vunpack.c.h.b16 %v293
    %v1066 = vunpack.c.l.b16 %v294
    %v1067 = vunpack.c.h.b16 %v294
    %v1068 = vunpack.c.l.b16 %v295
    %v1069 = vunpack.c.h.b16 %v295
    %v1070 = vunpack.c.l.b16 %v296
    %v1071 = vunpack.c.h.b16 %v296
    %v1072 = vunpack.c.l.b16 %v297
    %v1073 = vunpack.c.h.b16 %v297
    %v1074 = vunpack.c.l.b16 %v298
    %v1075 = vunpack.c.h.b16 %v298
    %v1076 = vunpack.c.l.b16 %v299
    %v1077 = vunpack.c.h.b16 %v299
    %v1078 = vunpack.c.l.b16 %v300
    %v1079 = vunpack.c.h.b16 %v300
    %v1080 = vunpack.c.l.b16 %v301
    %v1081 = vunpack.c.h.b16 %v301
    %v1082 = vunpack.c.l.b16 %v302
    %v1083 = vunpack.c.h.b16 %v302
    %v1084 = vunpack.c.l.b16 %v303
    %v1085 = vunpack.c.h.b16 %v303
    %v1086 = vunpack.c.l.b16 %v304
    %v1087 = vunpack.c.h.b16 %v304
    %v1088 = vunpack.c.l.b16 %v305
    %v1089 = vunpack.c.h.b16 %v305
    %v1090 = vunpack.c.l.b16 %v306
    %v1091 = vunpack.c.h.b16 %v306
    %v1092 = vunpack.c.l.b16 %v307
    %v1093 = vunpack.c.h.b16 %v307
    %v1094 = vunpack.c.l.b16 %v308
    %v1095 = vunpack.c.h.b16 %v308
    %v1096 = vunpack.c.l.b16 %v309
    %v1097 = vunpack.c.h.b16 %v309
    %v1098 = vunpack.c.l.b16 %v310
    %v1099 = vunpack.c.h.b16 %v310
    %v1100 = vunpack.c.l.b16 %v311
    %v1101 = vunpack.c.h.b16 %v311
    %v1102 = vunpack.c.l.b16 %v312
    %v1103 = vunpack.c.h.b16 %v312
    %v1104 = vunpack.c.l.b16 %v313
    %v1105 = vunpack.c.h.b16 %v313
    %v1106 = vunpack.c.l.b16 %v314
    %v1107 = vunpack.c.h.b16 %v314
    %v1108 = vunpack.c.l.b16 %v315
    %v1109 = vunpack.c.h.b16 %v315
    %v1110 = vunpack.c.l.b16 %v316
    %v1111 = vunpack.c.h.b16 %v316
    %v1112 = vunpack.c.l.b16 %v317
    %v1113 = vunpack.c.h.b16 %v317
    %v1114 = vpack.c.b16 %v606, %v602
    %v1115 = vpack.c.b16 %v607, %v603
    %v1116 = vpack.c.b16 %v608, %v604
    %v1117 = vpack.c.b16 %v609, %v605
    %v1118 = vpack.c.b16 %v614, %v610
    %v1119 = vpack.c.b16 %v615, %v611
    %v1120 = vpack.c.b16 %v616, %v612
    %v1121 = vpack.c.b16 %v617, %v613
    %v1122 = vpack.c.b16 %v622, %v618
    %v1123 = vpack.c.b16 %v623, %v619
    %v1124 = vpack.c.b16 %v624, %v620
    %v1125 = vpack.c.b16 %v625, %v621
    %v1126 = vpack.c.b16 %v630, %v626
    %v1127 = vpack.c.b16 %v631, %v627
    %v1128 = vpack.c.b16 %v632, %v628
    %v1129 = vpack.c.b16 %v633, %v629
    %v1130 = vpack.c.b16 %v638, %v634
    %v1131 = vpack.c.b16 %v639, %v635
    %v1132 = vpack.c.b16 %v640, %v636
    %v1133 = vpack.c.b16 %v641, %v637
    %v1134 = vpack.c.b16 %v646, %v642
    %v1135 = vpack.c.b16 %v647, %v643
    %v1136 = vpack.c.b16 %v648, %v644
    %v1137 = vpack.c.b16 %v649, %v645
    %v1138 = vpack.c.b16 %v654, %v650
    %v1139 = vpack.c.b16 %v655, %v651
    %v1140 = vpack.c.b16 %v656, %v652
    %v1141 = vpack.c.b16 %v657, %v653
    %v1142 = vpack.c.b16 %v662, %v658
    %v1143 = vpack.c.b16 %v663, %v659
    %v1144 = vpack.c.b16 %v664, %v660
    %v1145 = vpack.c.b16 %v665, %v661
    %v1146 = vpack.c.b16 %v670, %v666
    %v1147 = vpack.c.b16 %v671, %v667
    %v1148 = vpack.c.b16 %v672, %v668
    %v1149 = vpack.c.b16 %v673, %v669
    %v1150 = vpack.c.b16 %v678, %v674
    %v1151 = vpack.c.b16 %v679, %v675
    %v1152 = vpack.c.b16 %v680, %v676
    %v1153 = vpack.c.b16 %v681, %v677
    %v1154 = vpack.c.b16 %v686, %v682
    %v1155 = vpack.c.b16 %v687, %v683
    %v1156 = vpack.c.b16 %v688, %v684
    %v1157 = vpack.c.b16 %v689, %v685
    %v1158 = vpack.c.b16 %v694, %v690
    %v1159 = vpack.c.b16 %v695, %v691
    %v1160 = vpack.c.b16 %v696, %v692
    %v1161 = vpack.c.b16 %v697, %v693
    %v1162 = vpack.c.b16 %v702, %v698
    %v1163 = vpack.c.b16 %v703, %v699
    %v1164 = vpack.c.b16 %v704, %v700
    %v1165 = vpack.c.b16 %v705, %v701
    %v1166 = vpack.c.b16 %v710, %v706
    %v1167 = vpack.c.b16 %v711, %v707
    %v1168 = vpack.c.b16 %v712, %v708
    %v1169 = vpack.c.b16 %v713, %v709
    %v1170 = vpack.c.b16 %v718, %v714
    %v1171 = vpack.c.b16 %v719, %v715
    %v1172 = vpack.c.b16 %v720, %v716
    %v1173 = vpack.c.b16 %v721, %v717
    %v1174 = vpack.c.b16 %v726, %v722
    %v1175 = vpack.c.b16 %v727, %v723
    %v1176 = vpack.c.b16 %v728, %v724
    %v1177 = vpack.c.b16 %v729, %v725
    %v1178 = vpack.c.b16 %v734, %v730
    %v1179 = vpack.c.b16 %v735, %v731
    %v1180 = vpack.c.b16 %v736, %v732
    %v1181 = vpack.c.b16 %v737, %v733
    %v1182 = vpack.c.b16 %v742, %v738
    %v1183 = vpack.c.b16 %v743, %v739
    %v1184 = vpack.c.b16 %v744, %v740
    %v1185 = vpack.c.b16 %v745, %v741
    %v1186 = vpack.c.b16 %v750, %v746
    %v1187 = vpack.c.b16 %v751, %v747
    %v1188 = vpack.c.b16 %v752, %v748
    %v1189 = vpack.c.b16 %v753, %v749
    %v1190 = vpack.c.b16 %v758, %v754
    %v1191 = vpack.c.b16 %v759, %v755
    %v1192 = vpack.c.b16 %v760, %v756
    %v1193 = vpack.c.b16 %v761, %v757
    %v1194 = vpack.c.b16 %v766, %v762
    %v1195 = vpack.c.b16 %v767, %v763
    %v1196 = vpack.c.b16 %v768, %v764
    %v1197 = vpack.c.b16 %v769, %v765
    %v1198 = vpack.c.b16 %v774, %v770
    %v1199 = vpack.c.b16 %v775, %v771
    %v1200 = vpack.c.b16 %v776, %v772
    %v1201 = vpack.c.b16 %v777, %v773
    %v1202 = vpack.c.b16 %v782, %v778
    %v1203 = vpack.c.b16 %v783, %v779
    %v1204 = vpack.c.b16 %v784, %v780
    %v1205 = vpack.c.b16 %v785, %v781
    %v1206 = vpack.c.b16 %v790, %v786
    %v1207 = vpack.c.b16 %v791, %v787
    %v1208 = vpack.c.b16 %v792, %v788
    %v1209 = vpack.c.b16 %v793, %v789
    %v1210 = vpack.c.b16 %v798, %v794
    %v1211 = vpack.c.b16 %v799, %v795
    %v1212 = vpack.c.b16 %v800, %v796
    %v1213 = vpack.c.b16 %v801, %v797
    %v1214 = vpack.c.b16 %v806, %v802
    %v1215 = vpack.c.b16 %v807, %v803
    %v1216 = vpack.c.b16 %v808, %v804
    %v1217 = vpack.c.b16 %v809, %v805
    %v1218 = vpack.c.b16 %v814, %v810
    %v1219 = vpack.c.b16 %v815, %v811
    %v1220 = vpack.c.b16 %v816, %v812
    %v1221 = vpack.c.b16 %v817, %v813
    %v1222 = vpack.c.b16 %v822, %v818
    %v1223 = vpack.c.b16 %v823, %v819
    %v1224 = vpack.c.b16 %v824, %v820
    %v1225 = vpack.c.b16 %v825, %v821
    %v1226 = vpack.c.b16 %v830, %v826
    %v1227 = vpack.c.b16 %v831, %v827
    %v1228 = vpack.c.b16 %v832, %v828
    %v1229 = vpack.c.b16 %v833, %v829
    %v1230 = vpack.c.b16 %v838, %v834
    %v1231 = vpack.c.b16 %v839, %v835
    %v1232 = vpack.c.b16 %v840, %v836
    %v1233 = vpack.c.b16 %v841, %v837
    %v1234 = vpack.c.b16 %v846, %v842
    %v1235 = vpack.c.b16 %v847, %v843
    %v1236 = vpack.c.b16 %v848, %v844
    %v1237 = vpack.c.b16 %v849, %v845
    %v1238 = vpack.c.b16 %v854, %v850
    %v1239 = vpack.c.b16 %v855, %v851
    %v1240 = vpack.c.b16 %v856, %v852
    %v1241 = vpack.c.b16 %v857, %v853
    %v1242 = vpack.c.b16 %v862, %v858
    %v1243 = vpack.c.b16 %v863, %v859
    %v1244 = vpack.c.b16 %v864, %v860
    %v1245 = vpack.c.b16 %v865, %v861
    %v1246 = vpack.c.b16 %v870, %v866
    %v1247 = vpack.c.b16 %v871, %v867
    %v1248 = vpack.c.b16 %v872, %v868
    %v1249 = vpack.c.b16 %v873, %v869
    %v1250 = vpack.c.b16 %v878, %v874
    %v1251 = vpack.c.b16 %v879, %v875
    %v1252 = vpack.c.b16 %v880, %v876
    %v1253 = vpack.c.b16 %v881, %v877
    %v1254 = vpack.c.b16 %v886, %v882
    %v1255 = vpack.c.b16 %v887, %v883
    %v1256 = vpack.c.b16 %v888, %v884
    %v1257 = vpack.c.b16 %v889, %v885
    %v1258 = vpack.c.b16 %v894, %v890
    %v1259 = vpack.c.b16 %v895, %v891
    %v1260 = vpack.c.b16 %v896, %v892
    %v1261 = vpack.c.b16 %v897, %v893
    %v1262 = vpack.c.b16 %v902, %v898
    %v1263 = vpack.c.b16 %v903, %v899
    %v1264 = vpack.c.b16 %v904, %v900
    %v1265 = vpack.c.b16 %v905, %v901
    %v1266 = vpack.c.b16 %v910, %v906
    %v1267 = vpack.c.b16 %v911, %v907
    %v1268 = vpack.c.b16 %v912, %v908
    %v1269 = vpack.c.b16 %v913, %v909
    %v1270 = vpack.c.b16 %v918, %v914
    %v1271 = vpack.c.b16 %v919, %v915
    %v1272 = vpack.c.b16 %v920, %v916
    %v1273 = vpack.c.b16 %v921, %v917
    %v1274 = vpack.c.b16 %v926, %v922
    %v1275 = vpack.c.b16 %v927, %v923
    %v1276 = vpack.c.b16 %v928, %v924
    %v1277 = vpack.c.b16 %v929, %v925
    %v1278 = vpack.c.b16 %v934, %v930
    %v1279 = vpack.c.b16 %v935, %v931
    %v1280 = vpack.c.b16 %v936, %v932
    %v1281 = vpack.c.b16 %v937, %v933
    %v1282 = vpack.c.b16 %v942, %v938
    %v1283 = vpack.c.b16 %v943, %v939
    %v1284 = vpack.c.b16 %v944, %v940
    %v1285 = vpack.c.b16 %v945, %v941
    %v1286 = vpack.c.b16 %v950, %v946
    %v1287 = vpack.c.b16 %v951, %v947
    %v1288 = vpack.c.b16 %v952, %v948
    %v1289 = vpack.c.b16 %v953, %v949
    %v1290 = vpack.c.b16 %v958, %v954
    %v1291 = vpack.c.b16 %v959, %v955
    %v1292 = vpack.c.b16 %v960, %v956
    %v1293 = vpack.c.b16 %v961, %v957
    %v1294 = vpack.c.b16 %v966, %v962
    %v1295 = vpack.c.b16 %v967, %v963
    %v1296 = vpack.c.b16 %v968, %v964
    %v1297 = vpack.c.b16 %v969, %v965
    %v1298 = vpack.c.b16 %v974, %v970
    %v1299 = vpack.c.b16 %v975, %v971
    %v1300 = vpack.c.b16 %v976, %v972
    %v1301 = vpack.c.b16 %v977, %v973
    %v1302 = vpack.c.b16 %v982, %v978
    %v1303 = vpack.c.b16 %v983, %v979
    %v1304 = vpack.c.b16 %v984, %v980
    %v1305 = vpack.c.b16 %v985, %v981
    %v1306 = vpack.c.b16 %v990, %v986
    %v1307 = vpack.c.b16 %v991, %v987
    %v1308 = vpack.c.b16 %v992, %v988
    %v1309 = vpack.c.b16 %v993, %v989
    %v1310 = vpack.c.b16 %v998, %v994
    %v1311 = vpack.c.b16 %v999, %v995
    %v1312 = vpack.c.b16 %v1000, %v996
    %v1313 = vpack.c.b16 %v1001, %v997
    %v1314 = vpack.c.b16 %v1006, %v1002
    %v1315 = vpack.c.b16 %v1007, %v1003
    %v1316 = vpack.c.b16 %v1008, %v1004
    %v1317 = vpack.c.b16 %v1009, %v1005
    %v1318 = vpack.c.b16 %v1014, %v1010
    %v1319 = vpack.c.b16 %v1015, %v1011
    %v1320 = vpack.c.b16 %v1016, %v1012
    %v1321 = vpack.c.b16 %v1017, %v1013
    %v1322 = vpack.c.b16 %v1022, %v1018
    %v1323 = vpack.c.b16 %v1023, %v1019
    %v1324 = vpack.c.b16 %v1024, %v1020
    %v1325 = vpack.c.b16 %v1025, %v1021
    %v1326 = vpack.c.b16 %v1030, %v1026
    %v1327 = vpack.c.b16 %v1031, %v1027
    %v1328 = vpack.c.b16 %v1032, %v1028
    %v1329 = vpack.c.b16 %v1033, %v1029
    %v1330 = vpack.c.b16 %v1038, %v1034
    %v1331 = vpack.c.b16 %v1039, %v1035
    %v1332 = vpack.c.b16 %v1040, %v1036
    %v1333 = vpack.c.b16 %v1041, %v1037
    %v1334 = vpack.c.b16 %v1046, %v1042
    %v1335 = vpack.c.b16 %v1047, %v1043
    %v1336 = vpack.c.b16 %v1048, %v1044
    %v1337 = vpack.c.b16 %v1049, %v1045
    %v1338 = vpack.c.b16 %v1054, %v1050
    %v1339 = vpack.c.b16 %v1055, %v1051
    %v1340 = vpack.c.b16 %v1056, %v1052
    %v1341 = vpack.c.b16 %v1057, %v1053
    %v1342 = vpack.c.b16 %v1062, %v1058
    %v1343 = vpack.c.b16 %v1063, %v1059
    %v1344 = vpack.c.b16 %v1064, %v1060
    %v1345 = vpack.c.b16 %v1065, %v1061
    %v1346 = vpack.c.b16 %v1070, %v1066
    %v1347 = vpack.c.b16 %v1071, %v1067
    %v1348 = vpack.c.b16 %v1072, %v1068
    %v1349 = vpack.c.b16 %v1073, %v1069
    %v1350 = vpack.c.b16 %v1078, %v1074
    %v1351 = vpack.c.b16 %v1079, %v1075
    %v1352 = vpack.c.b16 %v1080, %v1076
    %v1353 = vpack.c.b16 %v1081, %v1077
    %v1354 = vpack.c.b16 %v1086, %v1082
    %v1355 = vpack.c.b16 %v1087, %v1083
    %v1356 = vpack.c.b16 %v1088, %v1084
    %v1357 = vpack.c.b16 %v1089, %v1085
    %v1358 = vpack.c.b16 %v1094, %v1090
    %v1359 = vpack.c.b16 %v1095, %v1091
    %v1360 = vpack.c.b16 %v1096, %v1092
    %v1361 = vpack.c.b16 %v1097, %v1093
    %v1362 = vpack.c.b16 %v1102, %v1098
    %v1363 = vpack.c.b16 %v1103, %v1099
    %v1364 = vpack.c.b16 %v1104, %v1100
    %v1365 = vpack.c.b16 %v1105, %v1101
    %v1366 = vpack.c.b16 %v1110, %v1106
    %v1367 = vpack.c.b16 %v1111, %v1107
    %v1368 = vpack.c.b16 %v1112, %v1108
    %v1369 = vpack.c.b16 %v1113, %v1109
    %1626 = vmatprep.subr.bf16.mxu0 %v1115
    %1627 = vmatpush1.bf16.msra.mxu0 %v1114
    %1628 = vmatprep.subr.bf16.mxu0 %v1119
    %1629 = vmatpush1.bf16.msra.mxu0 %v1118
    %1630 = vmatprep.subr.bf16.mxu0 %v1123
    %1631 = vmatpush1.bf16.msra.mxu0 %v1122
    %1632 = vmatprep.subr.bf16.mxu0 %v1127
    %1633 = vmatpush1.bf16.msra.mxu0 %v1126
    %1634 = vmatprep.subr.bf16.mxu0 %v1131
    %1635 = vmatpush1.bf16.msra.mxu0 %v1130
    %1636 = vmatprep.subr.bf16.mxu0 %v1135
    %1637 = vmatpush1.bf16.msra.mxu0 %v1134
    %1638 = vmatprep.subr.bf16.mxu0 %v1139
    %1639 = vmatpush1.bf16.msra.mxu0 %v1138
    %1640 = vmatprep.subr.bf16.mxu0 %v1143
    %1641 = vmatpush1.bf16.msra.mxu0 %v1142
    %1642 = vmatprep.subr.bf16.mxu0 %v1147
    %1643 = vmatpush1.bf16.msra.mxu0 %v1146
    %1644 = vmatprep.subr.bf16.mxu0 %v1151
    %1645 = vmatpush1.bf16.msra.mxu0 %v1150
    %1646 = vmatprep.subr.bf16.mxu0 %v1155
    %1647 = vmatpush1.bf16.msra.mxu0 %v1154
    %1648 = vmatprep.subr.bf16.mxu0 %v1159
    %1649 = vmatpush1.bf16.msra.mxu0 %v1158
    %1650 = vmatprep.subr.bf16.mxu0 %v1163
    %1651 = vmatpush1.bf16.msra.mxu0 %v1162
    %1652 = vmatprep.subr.bf16.mxu0 %v1167
    %1653 = vmatpush1.bf16.msra.mxu0 %v1166
    %1654 = vmatprep.subr.bf16.mxu0 %v1171
    %1655 = vmatpush1.bf16.msra.mxu0 %v1170
    %1656 = vmatprep.subr.bf16.mxu0 %v1175
    %1657 = vmatpush1.bf16.msra.mxu0 %v1174
    %1658 = vmatprep.mubr.bf16.mxu0 %v331
    %1659 = vmatmul.mubr.bf16.gmra.mrb[0].mxu0 %v330
    %v1660 = vpop.f32.mrb[0].mxu0
    %v1661 = vadd.f32 0.0, %v1660
    %v1662 = vpop.f32.mrb[0].mxu0
    %v1663 = vadd.f32 0.0, %v1662
    %v1664 = vpop.f32.mrb[0].mxu0
    %v1665 = vpop.f32.mrb[0].mxu0
    %1666 = vdwg.mxu0
    %1667 = vmatprep.subr.bf16.mxu0 %v1179
    %1668 = vmatpush1.bf16.msra.mxu0 %v1178
    %1669 = vmatprep.subr.bf16.mxu0 %v1183
    %1670 = vmatpush1.bf16.msra.mxu0 %v1182
    %1671 = vmatprep.subr.bf16.mxu0 %v1187
    %1672 = vmatpush1.bf16.msra.mxu0 %v1186
    %1673 = vmatprep.subr.bf16.mxu0 %v1191
    %1674 = vmatpush1.bf16.msra.mxu0 %v1190
    %1675 = vmatprep.subr.bf16.mxu0 %v1195
    %1676 = vmatpush1.bf16.msra.mxu0 %v1194
    %1677 = vmatprep.subr.bf16.mxu0 %v1199
    %1678 = vmatpush1.bf16.msra.mxu0 %v1198
    %1679 = vmatprep.subr.bf16.mxu0 %v1203
    %1680 = vmatpush1.bf16.msra.mxu0 %v1202
    %1681 = vmatprep.subr.bf16.mxu0 %v1207
    %1682 = vmatpush1.bf16.msra.mxu0 %v1206
    %1683 = vmatprep.subr.bf16.mxu0 %v1211
    %1684 = vmatpush1.bf16.msra.mxu0 %v1210
    %1685 = vmatprep.subr.bf16.mxu0 %v1215
    %1686 = vmatpush1.bf16.msra.mxu0 %v1214
    %1687 = vmatprep.subr.bf16.mxu0 %v1219
    %1688 = vmatpush1.bf16.msra.mxu0 %v1218
    %1689 = vmatprep.subr.bf16.mxu0 %v1223
    %1690 = vmatpush1.bf16.msra.mxu0 %v1222
    %1691 = vmatprep.subr.bf16.mxu0 %v1227
    %1692 = vmatpush1.bf16.msra.mxu0 %v1226
    %1693 = vmatprep.subr.bf16.mxu0 %v1231
    %1694 = vmatpush1.bf16.msra.mxu0 %v1230
    %1695 = vmatprep.subr.bf16.mxu0 %v1235
    %1696 = vmatpush1.bf16.msra.mxu0 %v1234
    %1697 = vmatprep.subr.bf16.mxu0 %v1239
    %1698 = vmatpush1.bf16.msra.mxu0 %v1238
    %1699 = vmatprep.mubr.bf16.mxu0 %v333
    %1700 = vmatmul.mubr.bf16.gmra.mrb[0].mxu0 %v332
    %v1701 = vpop.f32.mrb[0].mxu0
    %v1702 = vadd.f32 %v1661, %v1701
    %v1703 = vpop.f32.mrb[0].mxu0
    %v1704 = vadd.f32 %v1663, %v1703
    %v1705 = vpop.f32.mrb[0].mxu0
    %v1706 = vpop.f32.mrb[0].mxu0
    %1707 = vdwg.mxu0
    %1708 = vmatprep.subr.bf16.mxu0 %v1243
    %1709 = vmatpush1.bf16.msra.mxu0 %v1242
    %1710 = vmatprep.subr.bf16.mxu0 %v1247
    %1711 = vmatpush1.bf16.msra.mxu0 %v1246
    %1712 = vmatprep.subr.bf16.mxu0 %v1251
    %1713 = vmatpush1.bf16.msra.mxu0 %v1250
    %1714 = vmatprep.subr.bf16.mxu0 %v1255
    %1715 = vmatpush1.bf16.msra.mxu0 %v1254
    %1716 = vmatprep.subr.bf16.mxu0 %v1259
    %1717 = vmatpush1.bf16.msra.mxu0 %v1258
    %1718 = vmatprep.subr.bf16.mxu0 %v1263
    %1719 = vmatpush1.bf16.msra.mxu0 %v1262
    %1720 = vmatprep.subr.bf16.mxu0 %v1267
    %1721 = vmatpush1.bf16.msra.mxu0 %v1266
    %1722 = vmatprep.subr.bf16.mxu0 %v1271
    %1723 = vmatpush1.bf16.msra.mxu0 %v1270
    %1724 = vmatprep.subr.bf16.mxu0 %v1275
    %1725 = vmatpush1.bf16.msra.mxu0 %v1274
    %1726 = vmatprep.subr.bf16.mxu0 %v1279
    %1727 = vmatpush1.bf16.msra.mxu0 %v1278
    %1728 = vmatprep.subr.bf16.mxu0 %v1283
    %1729 = vmatpush1.bf16.msra.mxu0 %v1282
    %1730 = vmatprep.subr.bf16.mxu0 %v1287
    %1731 = vmatpush1.bf16.msra.mxu0 %v1286
    %1732 = vmatprep.subr.bf16.mxu0 %v1291
    %1733 = vmatpush1.bf16.msra.mxu0 %v1290
    %1734 = vmatprep.subr.bf16.mxu0 %v1295
    %1735 = vmatpush1.bf16.msra.mxu0 %v1294
    %1736 = vmatprep.subr.bf16.mxu0 %v1299
    %1737 = vmatpush1.bf16.msra.mxu0 %v1298
    %1738 = vmatprep.subr.bf16.mxu0 %v1303
    %1739 = vmatpush1.bf16.msra.mxu0 %v1302
    %1740 = vmatprep.mubr.bf16.mxu0 %v335
    %1741 = vmatmul.mubr.bf16.gmra.mrb[0].mxu0 %v334
    %v1742 = vpop.f32.mrb[0].mxu0
    %v1743 = vadd.f32 %v1702, %v1742
    %v1744 = vpop.f32.mrb[0].mxu0
    %v1745 = vadd.f32 %v1704, %v1744
    %v1746 = vpop.f32.mrb[0].mxu0
    %v1747 = vpop.f32.mrb[0].mxu0
    %1748 = vdwg.mxu0
    %1749 = vmatprep.subr.bf16.mxu0 %v1307
    %1750 = vmatpush1.bf16.msra.mxu0 %v1306
    %1751 = vmatprep.subr.bf16.mxu0 %v1311
    %1752 = vmatpush1.bf16.msra.mxu0 %v1310
    %1753 = vmatprep.subr.bf16.mxu0 %v1315
    %1754 = vmatpush1.bf16.msra.mxu0 %v1314
    %1755 = vmatprep.subr.bf16.mxu0 %v1319
    %1756 = vmatpush1.bf16.msra.mxu0 %v1318
    %1757 = vmatprep.subr.bf16.mxu0 %v1323
    %1758 = vmatpush1.bf16.msra.mxu0 %v1322
    %1759 = vmatprep.subr.bf16.mxu0 %v1327
    %1760 = vmatpush1.bf16.msra.mxu0 %v1326
    %1761 = vmatprep.subr.bf16.mxu0 %v1331
    %1762 = vmatpush1.bf16.msra.mxu0 %v1330
    %1763 = vmatprep.subr.bf16.mxu0 %v1335
    %1764 = vmatpush1.bf16.msra.mxu0 %v1334
    %1765 = vmatprep.subr.bf16.mxu0 %v1339
    %1766 = vmatpush1.bf16.msra.mxu0 %v1338
    %1767 = vmatprep.subr.bf16.mxu0 %v1343
    %1768 = vmatpush1.bf16.msra.mxu0 %v1342
    %1769 = vmatprep.subr.bf16.mxu0 %v1347
    %1770 = vmatpush1.bf16.msra.mxu0 %v1346
    %1771 = vmatprep.subr.bf16.mxu0 %v1351
    %1772 = vmatpush1.bf16.msra.mxu0 %v1350
    %1773 = vmatprep.subr.bf16.mxu0 %v1355
    %1774 = vmatpush1.bf16.msra.mxu0 %v1354
    %1775 = vmatprep.subr.bf16.mxu0 %v1359
    %1776 = vmatpush1.bf16.msra.mxu0 %v1358
    %1777 = vmatprep.subr.bf16.mxu0 %v1363
    %1778 = vmatpush1.bf16.msra.mxu0 %v1362
    %1779 = vmatprep.subr.bf16.mxu0 %v1367
    %1780 = vmatpush1.bf16.msra.mxu0 %v1366
    %1781 = vmatprep.mubr.bf16.mxu0 %v337
    %1782 = vmatmul.mubr.bf16.gmra.mrb[0].mxu0 %v336
    %v1783 = vpop.f32.mrb[0].mxu0
    %v1784 = vadd.f32 %v1743, %v1783
    %v1785 = vpop.f32.mrb[0].mxu0
    %v1786 = vadd.f32 %v1745, %v1785
    %v1787 = vpop.f32.mrb[0].mxu0
    %v1788 = vpop.f32.mrb[0].mxu0
    %1789 = vdwg.mxu0
    %1790 = vmatprep.subr.bf16.mxu0 %v1117
    %1791 = vmatpush1.bf16.msra.mxu0 %v1116
    %1792 = vmatprep.subr.bf16.mxu0 %v1121
    %1793 = vmatpush1.bf16.msra.mxu0 %v1120
    %1794 = vmatprep.subr.bf16.mxu0 %v1125
    %1795 = vmatpush1.bf16.msra.mxu0 %v1124
    %1796 = vmatprep.subr.bf16.mxu0 %v1129
    %1797 = vmatpush1.bf16.msra.mxu0 %v1128
    %1798 = vmatprep.subr.bf16.mxu0 %v1133
    %1799 = vmatpush1.bf16.msra.mxu0 %v1132
    %1800 = vmatprep.subr.bf16.mxu0 %v1137
    %1801 = vmatpush1.bf16.msra.mxu0 %v1136
    %1802 = vmatprep.subr.bf16.mxu0 %v1141
    %1803 = vmatpush1.bf16.msra.mxu0 %v1140
    %1804 = vmatprep.subr.bf16.mxu0 %v1145
    %1805 = vmatpush1.bf16.msra.mxu0 %v1144
    %1806 = vmatprep.subr.bf16.mxu0 %v1149
    %1807 = vmatpush1.bf16.msra.mxu0 %v1148
    %1808 = vmatprep.subr.bf16.mxu0 %v1153
    %1809 = vmatpush1.bf16.msra.mxu0 %v1152
    %1810 = vmatprep.subr.bf16.mxu0 %v1157
    %1811 = vmatpush1.bf16.msra.mxu0 %v1156
    %1812 = vmatprep.subr.bf16.mxu0 %v1161
    %1813 = vmatpush1.bf16.msra.mxu0 %v1160
    %1814 = vmatprep.subr.bf16.mxu0 %v1165
    %1815 = vmatpush1.bf16.msra.mxu0 %v1164
    %1816 = vmatprep.subr.bf16.mxu0 %v1169
    %1817 = vmatpush1.bf16.msra.mxu0 %v1168
    %1818 = vmatprep.subr.bf16.mxu0 %v1173
    %1819 = vmatpush1.bf16.msra.mxu0 %v1172
    %1820 = vmatprep.subr.bf16.mxu0 %v1177
    %1821 = vmatpush1.bf16.msra.mxu0 %v1176
    %1822 = vmatprep.mubr.bf16.mxu0 %v331
    %1823 = vmatmul.mubr.bf16.gmra.mrb[0].mxu0 %v330
    %v1824 = vpop.f32.mrb[0].mxu0
    %v1825 = vadd.f32 0.0, %v1824
    %v1826 = vpop.f32.mrb[0].mxu0
    %v1827 = vadd.f32 0.0, %v1826
    %v1828 = vpop.f32.mrb[0].mxu0
    %v1829 = vpop.f32.mrb[0].mxu0
    %1830 = vdwg.mxu0
    %1831 = vmatprep.subr.bf16.mxu0 %v1181
    %1832 = vmatpush1.bf16.msra.mxu0 %v1180
    %1833 = vmatprep.subr.bf16.mxu0 %v1185
    %1834 = vmatpush1.bf16.msra.mxu0 %v1184
    %1835 = vmatprep.subr.bf16.mxu0 %v1189
    %1836 = vmatpush1.bf16.msra.mxu0 %v1188
    %1837 = vmatprep.subr.bf16.mxu0 %v1193
    %1838 = vmatpush1.bf16.msra.mxu0 %v1192
    %1839 = vmatprep.subr.bf16.mxu0 %v1197
    %1840 = vmatpush1.bf16.msra.mxu0 %v1196
    %1841 = vmatprep.subr.bf16.mxu0 %v1201
    %1842 = vmatpush1.bf16.msra.mxu0 %v1200
    %1843 = vmatprep.subr.bf16.mxu0 %v1205
    %1844 = vmatpush1.bf16.msra.mxu0 %v1204
    %1845 = vmatprep.subr.bf16.mxu0 %v1209
    %1846 = vmatpush1.bf16.msra.mxu0 %v1208
    %1847 = vmatprep.subr.bf16.mxu0 %v1213
    %1848 = vmatpush1.bf16.msra.mxu0 %v1212
    %1849 = vmatprep.subr.bf16.mxu0 %v1217
    %1850 = vmatpush1.bf16.msra.mxu0 %v1216
    %1851 = vmatprep.subr.bf16.mxu0 %v1221
    %1852 = vmatpush1.bf16.msra.mxu0 %v1220
    %1853 = vmatprep.subr.bf16.mxu0 %v1225
    %1854 = vmatpush1.bf16.msra.mxu0 %v1224
    %1855 = vmatprep.subr.bf16.mxu0 %v1229
    %1856 = vmatpush1.bf16.msra.mxu0 %v1228
    %1857 = vmatprep.subr.bf16.mxu0 %v1233
    %1858 = vmatpush1.bf16.msra.mxu0 %v1232
    %1859 = vmatprep.subr.bf16.mxu0 %v1237
    %1860 = vmatpush1.bf16.msra.mxu0 %v1236
    %1861 = vmatprep.subr.bf16.mxu0 %v1241
    %1862 = vmatpush1.bf16.msra.mxu0 %v1240
    %1863 = vmatprep.mubr.bf16.mxu0 %v333
    %1864 = vmatmul.mubr.bf16.gmra.mrb[0].mxu0 %v332
    %v1865 = vpop.f32.mrb[0].mxu0
    %v1866 = vadd.f32 %v1825, %v1865
    %v1867 = vpop.f32.mrb[0].mxu0
    %v1868 = vadd.f32 %v1827, %v1867
    %v1869 = vpop.f32.mrb[0].mxu0
    %v1870 = vpop.f32.mrb[0].mxu0
    %1871 = vdwg.mxu0
    %1872 = vmatprep.subr.bf16.mxu0 %v1245
    %1873 = vmatpush1.bf16.msra.mxu0 %v1244
    %1874 = vmatprep.subr.bf16.mxu0 %v1249
    %1875 = vmatpush1.bf16.msra.mxu0 %v1248
    %1876 = vmatprep.subr.bf16.mxu0 %v1253
    %1877 = vmatpush1.bf16.msra.mxu0 %v1252
    %1878 = vmatprep.subr.bf16.mxu0 %v1257
    %1879 = vmatpush1.bf16.msra.mxu0 %v1256
    %1880 = vmatprep.subr.bf16.mxu0 %v1261
    %1881 = vmatpush1.bf16.msra.mxu0 %v1260
    %1882 = vmatprep.subr.bf16.mxu0 %v1265
    %1883 = vmatpush1.bf16.msra.mxu0 %v1264
    %1884 = vmatprep.subr.bf16.mxu0 %v1269
    %1885 = vmatpush1.bf16.msra.mxu0 %v1268
    %1886 = vmatprep.subr.bf16.mxu0 %v1273
    %1887 = vmatpush1.bf16.msra.mxu0 %v1272
    %1888 = vmatprep.subr.bf16.mxu0 %v1277
    %1889 = vmatpush1.bf16.msra.mxu0 %v1276
    %1890 = vmatprep.subr.bf16.mxu0 %v1281
    %1891 = vmatpush1.bf16.msra.mxu0 %v1280
    %1892 = vmatprep.subr.bf16.mxu0 %v1285
    %1893 = vmatpush1.bf16.msra.mxu0 %v1284
    %1894 = vmatprep.subr.bf16.mxu0 %v1289
    %1895 = vmatpush1.bf16.msra.mxu0 %v1288
    %1896 = vmatprep.subr.bf16.mxu0 %v1293
    %1897 = vmatpush1.bf16.msra.mxu0 %v1292
    %1898 = vmatprep.subr.bf16.mxu0 %v1297
    %1899 = vmatpush1.bf16.msra.mxu0 %v1296
    %1900 = vmatprep.subr.bf16.mxu0 %v1301
    %1901 = vmatpush1.bf16.msra.mxu0 %v1300
    %1902 = vmatprep.subr.bf16.mxu0 %v1305
    %1903 = vmatpush1.bf16.msra.mxu0 %v1304
    %1904 = vmatprep.mubr.bf16.mxu0 %v335
    %1905 = vmatmul.mubr.bf16.gmra.mrb[0].mxu0 %v334
    %v1906 = vpop.f32.mrb[0].mxu0
    %v1907 = vadd.f32 %v1866, %v1906
    %v1908 = vpop.f32.mrb[0].mxu0
    %v1909 = vadd.f32 %v1868, %v1908
    %v1910 = vpop.f32.mrb[0].mxu0
    %v1911 = vpop.f32.mrb[0].mxu0
    %1912 = vdwg.mxu0
    %1913 = vmatprep.subr.bf16.mxu0 %v1309
    %1914 = vmatpush1.bf16.msra.mxu0 %v1308
    %1915 = vmatprep.subr.bf16.mxu0 %v1313
    %1916 = vmatpush1.bf16.msra.mxu0 %v1312
    %1917 = vmatprep.subr.bf16.mxu0 %v1317
    %1918 = vmatpush1.bf16.msra.mxu0 %v1316
    %1919 = vmatprep.subr.bf16.mxu0 %v1321
    %1920 = vmatpush1.bf16.msra.mxu0 %v1320
    %1921 = vmatprep.subr.bf16.mxu0 %v1325
    %1922 = vmatpush1.bf16.msra.mxu0 %v1324
    %1923 = vmatprep.subr.bf16.mxu0 %v1329
    %1924 = vmatpush1.bf16.msra.mxu0 %v1328
    %1925 = vmatprep.subr.bf16.mxu0 %v1333
    %1926 = vmatpush1.bf16.msra.mxu0 %v1332
    %1927 = vmatprep.subr.bf16.mxu0 %v1337
    %1928 = vmatpush1.bf16.msra.mxu0 %v1336
    %1929 = vmatprep.subr.bf16.mxu0 %v1341
    %1930 = vmatpush1.bf16.msra.mxu0 %v1340
    %1931 = vmatprep.subr.bf16.mxu0 %v1345
    %1932 = vmatpush1.bf16.msra.mxu0 %v1344
    %1933 = vmatprep.subr.bf16.mxu0 %v1349
    %1934 = vmatpush1.bf16.msra.mxu0 %v1348
    %1935 = vmatprep.subr.bf16.mxu0 %v1353
    %1936 = vmatpush1.bf16.msra.mxu0 %v1352
    %1937 = vmatprep.subr.bf16.mxu0 %v1357
    %1938 = vmatpush1.bf16.msra.mxu0 %v1356
    %1939 = vmatprep.subr.bf16.mxu0 %v1361
    %1940 = vmatpush1.bf16.msra.mxu0 %v1360
    %1941 = vmatprep.subr.bf16.mxu0 %v1365
    %1942 = vmatpush1.bf16.msra.mxu0 %v1364
    %1943 = vmatprep.subr.bf16.mxu0 %v1369
    %1944 = vmatpush1.bf16.msra.mxu0 %v1368
    %1945 = vmatprep.mubr.bf16.mxu0 %v337
    %1946 = vmatmul.mubr.bf16.gmra.mrb[0].mxu0 %v336
    %v1947 = vpop.f32.mrb[0].mxu0
    %v1948 = vadd.f32 %v1907, %v1947
    %v1949 = vpop.f32.mrb[0].mxu0
    %v1950 = vadd.f32 %v1909, %v1949
    %v1951 = vpop.f32.mrb[0].mxu0
    %v1952 = vpop.f32.mrb[0].mxu0
    %1953 = vdwg.mxu0
    %v1954 = vmul.f32 %v1784, 0.2
    %v1955 = vmul.f32 %v1786, 0.2
    %v1956 = vmul.f32 %v1948, 0.2
    %v1957 = vmul.f32 %v1950, 0.2
    %v1958 = vmax.f32 %v1784, %v1954
    %v1959 = vmax.f32 %v1786, %v1955
    %v1960 = vmax.f32 %v1948, %v1956
    %v1961 = vmax.f32 %v1950, %v1957
    %v1962 = vpack.c.bf16 %v1958, %v1958
    %v1963 = vpack.c.bf16 %v1959, %v1959
    %v1964 = vpack.c.bf16 %v1960, %v1960
    %v1965 = vpack.c.bf16 %v1961, %v1961
    %v1966 = vld [vmem:[%s2] sm:$0xff]
    %v1967 = vld [vmem:[%s2 + $0x8] sm:$0xff]
    %v1968 = vld [vmem:[%s2 + $0x10] sm:$0xff]
    %v1969 = vld [vmem:[%s2 + $0x18] sm:$0xff]
    %v1970 = vld [vmem:[%s2 + $0x20] sm:$0xff]
    %v1971 = vld [vmem:[%s2 + $0x28] sm:$0xff]
    %v1972 = vld [vmem:[%s2 + $0x30] sm:$0xff]
    %v1973 = vld [vmem:[%s2 + $0x38] sm:$0xff]
    %v1974 = vld [vmem:[%s2 + $0x40] sm:$0xff]
    %v1975 = vld [vmem:[%s2 + $0x48] sm:$0xff]
    %v1976 = vld [vmem:[%s2 + $0x50] sm:$0xff]
    %v1977 = vld [vmem:[%s2 + $0x58] sm:$0xff]
    %v1978 = vld [vmem:[%s2 + $0x60] sm:$0xff]
    %v1979 = vld [vmem:[%s2 + $0x68] sm:$0xff]
    %v1980 = vld [vmem:[%s2 + $0x70] sm:$0xff]
    %v1981 = vld [vmem:[%s2 + $0x78] sm:$0xff]
    %v1982 = vld [vmem:[%s2 + $0x80] sm:$0xff]
    %v1983 = vld [vmem:[%s2 + $0x88] sm:$0xff]
    %v1984 = vld [vmem:[%s2 + $0x90] sm:$0xff]
    %v1985 = vld [vmem:[%s2 + $0x98] sm:$0xff]
    %v1986 = vld [vmem:[%s2 + $0xa0] sm:$0xff]
    %v1987 = vld [vmem:[%s2 + $0xa8] sm:$0xff]
    %v1988 = vld [vmem:[%s2 + $0xb0] sm:$0xff]
    %v1989 = vld [vmem:[%s2 + $0xb8] sm:$0xff]
    %v1990 = vld [vmem:[%s2 + $0xc0] sm:$0xff]
    %v1991 = vld [vmem:[%s2 + $0xc8] sm:$0xff]
    %v1992 = vld [vmem:[%s2 + $0xd0] sm:$0xff]
    %v1993 = vld [vmem:[%s2 + $0xd8] sm:$0xff]
    %v1994 = vld [vmem:[%s2 + $0xe0] sm:$0xff]
    %v1995 = vld [vmem:[%s2 + $0xe8] sm:$0xff]
    %v1996 = vld [vmem:[%s2 + $0xf0] sm:$0xff]
    %v1997 = vld [vmem:[%s2 + $0xf8] sm:$0xff]
    %v1998 = vld [vmem:[%s2 + $0x100] sm:$0xff]
    %v1999 = vld [vmem:[%s2 + $0x108] sm:$0xff]
    %v2000 = vld [vmem:[%s2 + $0x110] sm:$0xff]
    %v2001 = vld [vmem:[%s2 + $0x118] sm:$0xff]
    %v2002 = vld [vmem:[%s2 + $0x120] sm:$0xff]
    %v2003 = vld [vmem:[%s2 + $0x128] sm:$0xff]
    %v2004 = vld [vmem:[%s2 + $0x130] sm:$0xff]
    %v2005 = vld [vmem:[%s2 + $0x138] sm:$0xff]
    %v2006 = vld [vmem:[%s2 + $0x140] sm:$0xff]
    %v2007 = vld [vmem:[%s2 + $0x148] sm:$0xff]
    %v2008 = vld [vmem:[%s2 + $0x150] sm:$0xff]
    %v2009 = vld [vmem:[%s2 + $0x158] sm:$0xff]
    %v2010 = vld [vmem:[%s2 + $0x160] sm:$0xff]
    %v2011 = vld [vmem:[%s2 + $0x168] sm:$0xff]
    %v2012 = vld [vmem:[%s2 + $0x170] sm:$0xff]
    %v2013 = vld [vmem:[%s2 + $0x178] sm:$0xff]
    %v2014 = vld [vmem:[%s2 + $0x180] sm:$0xff]
    %v2015 = vld [vmem:[%s2 + $0x188] sm:$0xff]
    %v2016 = vld [vmem:[%s2 + $0x190] sm:$0xff]
    %v2017 = vld [vmem:[%s2 + $0x198] sm:$0xff]
    %v2018 = vld [vmem:[%s2 + $0x1a0] sm:$0xff]
    %v2019 = vld [vmem:[%s2 + $0x1a8] sm:$0xff]
    %v2020 = vld [vmem:[%s2 + $0x1b0] sm:$0xff]
    %v2021 = vld [vmem:[%s2 + $0x1b8] sm:$0xff]
    %v2022 = vld [vmem:[%s2 + $0x1c0] sm:$0xff]
    %v2023 = vld [vmem:[%s2 + $0x1c8] sm:$0xff]
    %v2024 = vld [vmem:[%s2 + $0x1d0] sm:$0xff]
    %v2025 = vld [vmem:[%s2 + $0x1d8] sm:$0xff]
    %v2026 = vld [vmem:[%s2 + $0x1e0] sm:$0xff]
    %v2027 = vld [vmem:[%s2 + $0x1e8] sm:$0xff]
    %v2028 = vld [vmem:[%s2 + $0x1f0] sm:$0xff]
    %v2029 = vld [vmem:[%s2 + $0x1f8] sm:$0xff]
    %v2094 = vunpack.c.l.b16 %v1966
    %v2095 = vunpack.c.h.b16 %v1966
    %v2096 = vunpack.c.l.b16 %v1967
    %v2097 = vunpack.c.h.b16 %v1967
    %v2098 = vunpack.c.l.b16 %v1968
    %v2099 = vunpack.c.h.b16 %v1968
    %v2100 = vunpack.c.l.b16 %v1969
    %v2101 = vunpack.c.h.b16 %v1969
    %v2102 = vunpack.c.l.b16 %v1970
    %v2103 = vunpack.c.h.b16 %v1970
    %v2104 = vunpack.c.l.b16 %v1971
    %v2105 = vunpack.c.h.b16 %v1971
    %v2106 = vunpack.c.l.b16 %v1972
    %v2107 = vunpack.c.h.b16 %v1972
    %v2108 = vunpack.c.l.b16 %v1973
    %v2109 = vunpack.c.h.b16 %v1973
    %v2110 = vunpack.c.l.b16 %v1974
    %v2111 = vunpack.c.h.b16 %v1974
    %v2112 = vunpack.c.l.b16 %v1975
    %v2113 = vunpack.c.h.b16 %v1975
    %v2114 = vunpack.c.l.b16 %v1976
    %v2115 = vunpack.c.h.b16 %v1976
    %v2116 = vunpack.c.l.b16 %v1977
    %v2117 = vunpack.c.h.b16 %v1977
    %v2118 = vunpack.c.l.b16 %v1978
    %v2119 = vunpack.c.h.b16 %v1978
    %v2120 = vunpack.c.l.b16 %v1979
    %v2121 = vunpack.c.h.b16 %v1979
    %v2122 = vunpack.c.l.b16 %v1980
    %v2123 = vunpack.c.h.b16 %v1980
    %v2124 = vunpack.c.l.b16 %v1981
    %v2125 = vunpack.c.h.b16 %v1981
    %v2126 = vunpack.c.l.b16 %v1982
    %v2127 = vunpack.c.h.b16 %v1982
    %v2128 = vunpack.c.l.b16 %v1983
    %v2129 = vunpack.c.h.b16 %v1983
    %v2130 = vunpack.c.l.b16 %v1984
    %v2131 = vunpack.c.h.b16 %v1984
    %v2132 = vunpack.c.l.b16 %v1985
    %v2133 = vunpack.c.h.b16 %v1985
    %v2134 = vunpack.c.l.b16 %v1986
    %v2135 = vunpack.c.h.b16 %v1986
    %v2136 = vunpack.c.l.b16 %v1987
    %v2137 = vunpack.c.h.b16 %v1987
    %v2138 = vunpack.c.l.b16 %v1988
    %v2139 = vunpack.c.h.b16 %v1988
    %v2140 = vunpack.c.l.b16 %v1989
    %v2141 = vunpack.c.h.b16 %v1989
    %v2142 = vunpack.c.l.b16 %v1990
    %v2143 = vunpack.c.h.b16 %v1990
    %v2144 = vunpack.c.l.b16 %v1991
    %v2145 = vunpack.c.h.b16 %v1991
    %v2146 = vunpack.c.l.b16 %v1992
    %v2147 = vunpack.c.h.b16 %v1992
    %v2148 = vunpack.c.l.b16 %v1993
    %v2149 = vunpack.c.h.b16 %v1993
    %v2150 = vunpack.c.l.b16 %v1994
    %v2151 = vunpack.c.h.b16 %v1994
    %v2152 = vunpack.c.l.b16 %v1995
    %v2153 = vunpack.c.h.b16 %v1995
    %v2154 = vunpack.c.l.b16 %v1996
    %v2155 = vunpack.c.h.b16 %v1996
    %v2156 = vunpack.c.l.b16 %v1997
    %v2157 = vunpack.c.h.b16 %v1997
    %v2158 = vunpack.c.l.b16 %v1998
    %v2159 = vunpack.c.h.b16 %v1998
    %v2160 = vunpack.c.l.b16 %v1999
    %v2161 = vunpack.c.h.b16 %v1999
    %v2162 = vunpack.c.l.b16 %v2000
    %v2163 = vunpack.c.h.b16 %v2000
    %v2164 = vunpack.c.l.b16 %v2001
    %v2165 = vunpack.c.h.b16 %v2001
    %v2166 = vunpack.c.l.b16 %v2002
    %v2167 = vunpack.c.h.b16 %v2002
    %v2168 = vunpack.c.l.b16 %v2003
    %v2169 = vunpack.c.h.b16 %v2003
    %v2170 = vunpack.c.l.b16 %v2004
    %v2171 = vunpack.c.h.b16 %v2004
    %v2172 = vunpack.c.l.b16 %v2005
    %v2173 = vunpack.c.h.b16 %v2005
    %v2174 = vunpack.c.l.b16 %v2006
    %v2175 = vunpack.c.h.b16 %v2006
    %v2176 = vunpack.c.l.b16 %v2007
    %v2177 = vunpack.c.h.b16 %v2007
    %v2178 = vunpack.c.l.b16 %v2008
    %v2179 = vunpack.c.h.b16 %v2008
    %v2180 = vunpack.c.l.b16 %v2009
    %v2181 = vunpack.c.h.b16 %v2009
    %v2182 = vunpack.c.l.b16 %v2010
    %v2183 = vunpack.c.h.b16 %v2010
    %v2184 = vunpack.c.l.b16 %v2011
    %v2185 = vunpack.c.h.b16 %v2011
    %v2186 = vunpack.c.l.b16 %v2012
    %v2187 = vunpack.c.h.b16 %v2012
    %v2188 = vunpack.c.l.b16 %v2013
    %v2189 = vunpack.c.h.b16 %v2013
    %v2190 = vunpack.c.l.b16 %v2014
    %v2191 = vunpack.c.h.b16 %v2014
    %v2192 = vunpack.c.l.b16 %v2015
    %v2193 = vunpack.c.h.b16 %v2015
    %v2194 = vunpack.c.l.b16 %v2016
    %v2195 = vunpack.c.h.b16 %v2016
    %v2196 = vunpack.c.l.b16 %v2017
    %v2197 = vunpack.c.h.b16 %v2017
    %v2198 = vunpack.c.l.b16 %v2018
    %v2199 = vunpack.c.h.b16 %v2018
    %v2200 = vunpack.c.l.b16 %v2019
    %v2201 = vunpack.c.h.b16 %v2019
    %v2202 = vunpack.c.l.b16 %v2020
    %v2203 = vunpack.c.h.b16 %v2020
    %v2204 = vunpack.c.l.b16 %v2021
    %v2205 = vunpack.c.h.b16 %v2021
    %v2206 = vunpack.c.l.b16 %v2022
    %v2207 = vunpack.c.h.b16 %v2022
    %v2208 = vunpack.c.l.b16 %v2023
    %v2209 = vunpack.c.h.b16 %v2023
    %v2210 = vunpack.c.l.b16 %v2024
    %v2211 = vunpack.c.h.b16 %v2024
    %v2212 = vunpack.c.l.b16 %v2025
    %v2213 = vunpack.c.h.b16 %v2025
    %v2214 = vunpack.c.l.b16 %v2026
    %v2215 = vunpack.c.h.b16 %v2026
    %v2216 = vunpack.c.l.b16 %v2027
    %v2217 = vunpack.c.h.b16 %v2027
    %v2218 = vunpack.c.l.b16 %v2028
    %v2219 = vunpack.c.h.b16 %v2028
    %v2220 = vunpack.c.l.b16 %v2029
    %v2221 = vunpack.c.h.b16 %v2029
    %v2222 = vpack.c.b16 %v2096, %v2094
    %v2223 = vpack.c.b16 %v2097, %v2095
    %v2224 = vpack.c.b16 %v2100, %v2098
    %v2225 = vpack.c.b16 %v2101, %v2099
    %v2226 = vpack.c.b16 %v2104, %v2102
    %v2227 = vpack.c.b16 %v2105, %v2103
    %v2228 = vpack.c.b16 %v2108, %v2106
    %v2229 = vpack.c.b16 %v2109, %v2107
    %v2230 = vpack.c.b16 %v2112, %v2110
    %v2231 = vpack.c.b16 %v2113, %v2111
    %v2232 = vpack.c.b16 %v2116, %v2114
    %v2233 = vpack.c.b16 %v2117, %v2115
    %v2234 = vpack.c.b16 %v2120, %v2118
    %v2235 = vpack.c.b16 %v2121, %v2119
    %v2236 = vpack.c.b16 %v2124, %v2122
    %v2237 = vpack.c.b16 %v2125, %v2123
    %v2238 = vpack.c.b16 %v2128, %v2126
    %v2239 = vpack.c.b16 %v2129, %v2127
    %v2240 = vpack.c.b16 %v2132, %v2130
    %v2241 = vpack.c.b16 %v2133, %v2131
    %v2242 = vpack.c.b16 %v2136, %v2134
    %v2243 = vpack.c.b16 %v2137, %v2135
    %v2244 = vpack.c.b16 %v2140, %v2138
    %v2245 = vpack.c.b16 %v2141, %v2139
    %v2246 = vpack.c.b16 %v2144, %v2142
    %v2247 = vpack.c.b16 %v2145, %v2143
    %v2248 = vpack.c.b16 %v2148, %v2146
    %v2249 = vpack.c.b16 %v2149, %v2147
    %v2250 = vpack.c.b16 %v2152, %v2150
    %v2251 = vpack.c.b16 %v2153, %v2151
    %v2252 = vpack.c.b16 %v2156, %v2154
    %v2253 = vpack.c.b16 %v2157, %v2155
    %v2254 = vpack.c.b16 %v2160, %v2158
    %v2255 = vpack.c.b16 %v2161, %v2159
    %v2256 = vpack.c.b16 %v2164, %v2162
    %v2257 = vpack.c.b16 %v2165, %v2163
    %v2258 = vpack.c.b16 %v2168, %v2166
    %v2259 = vpack.c.b16 %v2169, %v2167
    %v2260 = vpack.c.b16 %v2172, %v2170
    %v2261 = vpack.c.b16 %v2173, %v2171
    %v2262 = vpack.c.b16 %v2176, %v2174
    %v2263 = vpack.c.b16 %v2177, %v2175
    %v2264 = vpack.c.b16 %v2180, %v2178
    %v2265 = vpack.c.b16 %v2181, %v2179
    %v2266 = vpack.c.b16 %v2184, %v2182
    %v2267 = vpack.c.b16 %v2185, %v2183
    %v2268 = vpack.c.b16 %v2188, %v2186
    %v2269 = vpack.c.b16 %v2189, %v2187
    %v2270 = vpack.c.b16 %v2192, %v2190
    %v2271 = vpack.c.b16 %v2193, %v2191
    %v2272 = vpack.c.b16 %v2196, %v2194
    %v2273 = vpack.c.b16 %v2197, %v2195
    %v2274 = vpack.c.b16 %v2200, %v2198
    %v2275 = vpack.c.b16 %v2201, %v2199
    %v2276 = vpack.c.b16 %v2204, %v2202
    %v2277 = vpack.c.b16 %v2205, %v2203
    %v2278 = vpack.c.b16 %v2208, %v2206
    %v2279 = vpack.c.b16 %v2209, %v2207
    %v2280 = vpack.c.b16 %v2212, %v2210
    %v2281 = vpack.c.b16 %v2213, %v2211
    %v2282 = vpack.c.b16 %v2216, %v2214
    %v2283 = vpack.c.b16 %v2217, %v2215
    %v2284 = vpack.c.b16 %v2220, %v2218
    %v2285 = vpack.c.b16 %v2221, %v2219
    %2350 = vmatprep.subr.bf16.mxu0 %v2223
    %2351 = vmatpush1.bf16.msra.mxu0 %v2222
    %2352 = vmatprep.subr.bf16.mxu0 %v2225
    %2353 = vmatpush1.bf16.msra.mxu0 %v2224
    %2354 = vmatprep.subr.bf16.mxu0 %v2227
    %2355 = vmatpush1.bf16.msra.mxu0 %v2226
    %2356 = vmatprep.subr.bf16.mxu0 %v2229
    %2357 = vmatpush1.bf16.msra.mxu0 %v2228
    %2358 = vmatprep.subr.bf16.mxu0 %v2231
    %2359 = vmatpush1.bf16.msra.mxu0 %v2230
    %2360 = vmatprep.subr.bf16.mxu0 %v2233
    %2361 = vmatpush1.bf16.msra.mxu0 %v2232
    %2362 = vmatprep.subr.bf16.mxu0 %v2235
    %2363 = vmatpush1.bf16.msra.mxu0 %v2234
    %2364 = vmatprep.subr.bf16.mxu0 %v2237
    %2365 = vmatpush1.bf16.msra.mxu0 %v2236
    %2366 = vmatprep.subr.bf16.mxu0 %v2239
    %2367 = vmatpush1.bf16.msra.mxu0 %v2238
    %2368 = vmatprep.subr.bf16.mxu0 %v2241
    %2369 = vmatpush1.bf16.msra.mxu0 %v2240
    %2370 = vmatprep.subr.bf16.mxu0 %v2243
    %2371 = vmatpush1.bf16.msra.mxu0 %v2242
    %2372 = vmatprep.subr.bf16.mxu0 %v2245
    %2373 = vmatpush1.bf16.msra.mxu0 %v2244
    %2374 = vmatprep.subr.bf16.mxu0 %v2247
    %2375 = vmatpush1.bf16.msra.mxu0 %v2246
    %2376 = vmatprep.subr.bf16.mxu0 %v2249
    %2377 = vmatpush1.bf16.msra.mxu0 %v2248
    %2378 = vmatprep.subr.bf16.mxu0 %v2251
    %2379 = vmatpush1.bf16.msra.mxu0 %v2250
    %2380 = vmatprep.subr.bf16.mxu0 %v2253
    %2381 = vmatpush1.bf16.msra.mxu0 %v2252
    %2382 = vmatprep.mubr.bf16.mxu0 %v1963
    %2383 = vmatmul.mubr.bf16.gmra.mrb[0].mxu0 %v1962
    %v2384 = vpop.f32.mrb[0].mxu0
    %v2385 = vadd.f32 0.0, %v2384
    %v2386 = vpop.f32.mrb[0].mxu0
    %v2387 = vadd.f32 0.0, %v2386
    %v2388 = vpop.f32.mrb[0].mxu0
    %v2389 = vpop.f32.mrb[0].mxu0
    %2390 = vdwg.mxu0
    %2391 = vmatprep.subr.bf16.mxu0 %v2255
    %2392 = vmatpush1.bf16.msra.mxu0 %v2254
    %2393 = vmatprep.subr.bf16.mxu0 %v2257
    %2394 = vmatpush1.bf16.msra.mxu0 %v2256
    %2395 = vmatprep.subr.bf16.mxu0 %v2259
    %2396 = vmatpush1.bf16.msra.mxu0 %v2258
    %2397 = vmatprep.subr.bf16.mxu0 %v2261
    %2398 = vmatpush1.bf16.msra.mxu0 %v2260
    %2399 = vmatprep.subr.bf16.mxu0 %v2263
    %2400 = vmatpush1.bf16.msra.mxu0 %v2262
    %2401 = vmatprep.subr.bf16.mxu0 %v2265
    %2402 = vmatpush1.bf16.msra.mxu0 %v2264
    %2403 = vmatprep.subr.bf16.mxu0 %v2267
    %2404 = vmatpush1.bf16.msra.mxu0 %v2266
    %2405 = vmatprep.subr.bf16.mxu0 %v2269
    %2406 = vmatpush1.bf16.msra.mxu0 %v2268
    %2407 = vmatprep.subr.bf16.mxu0 %v2271
    %2408 = vmatpush1.bf16.msra.mxu0 %v2270
    %2409 = vmatprep.subr.bf16.mxu0 %v2273
    %2410 = vmatpush1.bf16.msra.mxu0 %v2272
    %2411 = vmatprep.subr.bf16.mxu0 %v2275
    %2412 = vmatpush1.bf16.msra.mxu0 %v2274
    %2413 = vmatprep.subr.bf16.mxu0 %v2277
    %2414 = vmatpush1.bf16.msra.mxu0 %v2276
    %2415 = vmatprep.subr.bf16.mxu0 %v2279
    %2416 = vmatpush1.bf16.msra.mxu0 %v2278
    %2417 = vmatprep.subr.bf16.mxu0 %v2281
    %2418 = vmatpush1.bf16.msra.mxu0 %v2280
    %2419 = vmatprep.subr.bf16.mxu0 %v2283
    %2420 = vmatpush1.bf16.msra.mxu0 %v2282
    %2421 = vmatprep.subr.bf16.mxu0 %v2285
    %2422 = vmatpush1.bf16.msra.mxu0 %v2284
    %2423 = vmatprep.mubr.bf16.mxu0 %v1965
    %2424 = vmatmul.mubr.bf16.gmra.mrb[0].mxu0 %v1964
    %v2425 = vpop.f32.mrb[0].mxu0
    %v2426 = vadd.f32 %v2385, %v2425
    %v2427 = vpop.f32.mrb[0].mxu0
    %v2428 = vadd.f32 %v2387, %v2427
    %v2429 = vpop.f32.mrb[0].mxu0
    %v2430 = vpop.f32.mrb[0].mxu0
    %2431 = vdwg.mxu0
    %v2432 = vrot.slane %v2426, 4
    %v2433 = vadd.f32 %v2426, %v2432
    %v2434 = vrot.slane %v2433, 2
    %v2435 = vadd.f32 %v2433, %v2434
    %v2436 = vrot.slane %v2435, 1
    %v2437 = vadd.f32 %v2435, %v2436
    %v2438 = vrot.slane %v2428, 4
    %v2439 = vadd.f32 %v2428, %v2438
    %v2440 = vrot.slane %v2439, 2
    %v2441 = vadd.f32 %v2439, %v2440
    %v2442 = vrot.slane %v2441, 1
    %v2443 = vadd.f32 %v2441, %v2442
    %v2444 = vmul.f32 %v2426, %v2426
    %v2445 = vmul.f32 %v2428, %v2428
    %v2446 = vrot.slane %v2444, 4
    %v2447 = vadd.f32 %v2444, %v2446
    %v2448 = vrot.slane %v2447, 2
    %v2449 = vadd.f32 %v2447, %v2448
    %v2450 = vrot.slane %v2449, 1
    %v2451 = vadd.f32 %v2449, %v2450
    %v2452 = vrot.slane %v2445, 4
    %v2453 = vadd.f32 %v2445, %v2452
    %v2454 = vrot.slane %v2453, 2
    %v2455 = vadd.f32 %v2453, %v2454
    %v2456 = vrot.slane %v2455, 1
    %v2457 = vadd.f32 %v2455, %v2456
    %vm2458 = vcmask 1040384
    %v2459 = vsel %vm2458, %v2437, %v2451
    %v2460 = vsel %vm2458, %v2443, %v2457
    %v2461 = vld [vmem:[%s3] sm:$0xff]
    %v2462 = vld [vmem:[%s3 + $0x8] sm:$0xff]
    %v2463 = vld [vmem:[%s3 + $0x10] sm:$0xff]
    %v2464 = vld [vmem:[%s3 + $0x18] sm:$0xff]
    %v2465 = vld [vmem:[%s3 + $0x20] sm:$0xff]
    %v2466 = vld [vmem:[%s3 + $0x28] sm:$0xff]
    %v2467 = vld [vmem:[%s3 + $0x30] sm:$0xff]
    %v2468 = vld [vmem:[%s3 + $0x38] sm:$0xff]
    %v2469 = vld [vmem:[%s3 + $0x40] sm:$0xff]
    %v2470 = vld [vmem:[%s3 + $0x48] sm:$0xff]
    %v2471 = vld [vmem:[%s3 + $0x50] sm:$0xff]
    %v2472 = vld [vmem:[%s3 + $0x58] sm:$0xff]
    %v2473 = vld [vmem:[%s3 + $0x60] sm:$0xff]
    %v2474 = vld [vmem:[%s3 + $0x68] sm:$0xff]
    %v2475 = vld [vmem:[%s3 + $0x70] sm:$0xff]
    %v2476 = vld [vmem:[%s3 + $0x78] sm:$0xff]
    %v2477 = vld [vmem:[%s3 + $0x80] sm:$0xff]
    %v2478 = vld [vmem:[%s3 + $0x88] sm:$0xff]
    %v2479 = vld [vmem:[%s3 + $0x90] sm:$0xff]
    %v2480 = vld [vmem:[%s3 + $0x98] sm:$0xff]
    %v2481 = vld [vmem:[%s3 + $0xa0] sm:$0xff]
    %v2482 = vld [vmem:[%s3 + $0xa8] sm:$0xff]
    %v2483 = vld [vmem:[%s3 + $0xb0] sm:$0xff]
    %v2484 = vld [vmem:[%s3 + $0xb8] sm:$0xff]
    %v2485 = vld [vmem:[%s3 + $0xc0] sm:$0xff]
    %v2486 = vld [vmem:[%s3 + $0xc8] sm:$0xff]
    %v2487 = vld [vmem:[%s3 + $0xd0] sm:$0xff]
    %v2488 = vld [vmem:[%s3 + $0xd8] sm:$0xff]
    %v2489 = vld [vmem:[%s3 + $0xe0] sm:$0xff]
    %v2490 = vld [vmem:[%s3 + $0xe8] sm:$0xff]
    %v2491 = vld [vmem:[%s3 + $0xf0] sm:$0xff]
    %v2492 = vld [vmem:[%s3 + $0xf8] sm:$0xff]
    %2493 = vmatprep.subr.mxu0 0.0
    %2494 = vmatpush1.msra.mxu0 %v2461
    %2495 = vmatprep.subr.mxu0 0.0
    %2496 = vmatpush1.msra.mxu0 %v2462
    %2497 = vmatprep.subr.mxu0 0.0
    %2498 = vmatpush1.msra.mxu0 %v2463
    %2499 = vmatprep.subr.mxu0 0.0
    %2500 = vmatpush1.msra.mxu0 %v2464
    %2501 = vmatprep.subr.mxu0 0.0
    %2502 = vmatpush1.msra.mxu0 %v2465
    %2503 = vmatprep.subr.mxu0 0.0
    %2504 = vmatpush1.msra.mxu0 %v2466
    %2505 = vmatprep.subr.mxu0 0.0
    %2506 = vmatpush1.msra.mxu0 %v2467
    %2507 = vmatprep.subr.mxu0 0.0
    %2508 = vmatpush1.msra.mxu0 %v2468
    %2509 = vmatprep.subr.mxu0 0.0
    %2510 = vmatpush1.msra.mxu0 %v2469
    %2511 = vmatprep.subr.mxu0 0.0
    %2512 = vmatpush1.msra.mxu0 %v2470
    %2513 = vmatprep.subr.mxu0 0.0
    %2514 = vmatpush1.msra.mxu0 %v2471
    %2515 = vmatprep.subr.mxu0 0.0
    %2516 = vmatpush1.msra.mxu0 %v2472
    %2517 = vmatprep.subr.mxu0 0.0
    %2518 = vmatpush1.msra.mxu0 %v2473
    %2519 = vmatprep.subr.mxu0 0.0
    %2520 = vmatpush1.msra.mxu0 %v2474
    %2521 = vmatprep.subr.mxu0 0.0
    %2522 = vmatpush1.msra.mxu0 %v2475
    %2523 = vmatprep.subr.mxu0 0.0
    %2524 = vmatpush1.msra.mxu0 %v2476
    %2525 = vmatprep.subr.mxu0 0.0
    %2526 = vmatpush1.msra.mxu0 %v2477
    %2527 = vmatprep.subr.mxu0 0.0
    %2528 = vmatpush1.msra.mxu0 %v2478
    %2529 = vmatprep.subr.mxu0 0.0
    %2530 = vmatpush1.msra.mxu0 %v2479
    %2531 = vmatprep.subr.mxu0 0.0
    %2532 = vmatpush1.msra.mxu0 %v2480
    %2533 = vmatprep.subr.mxu0 0.0
    %2534 = vmatpush1.msra.mxu0 %v2481
    %2535 = vmatprep.subr.mxu0 0.0
    %2536 = vmatpush1.msra.mxu0 %v2482
    %2537 = vmatprep.subr.mxu0 0.0
    %2538 = vmatpush1.msra.mxu0 %v2483
    %2539 = vmatprep.subr.mxu0 0.0
    %2540 = vmatpush1.msra.mxu0 %v2484
    %2541 = vmatprep.subr.mxu0 0.0
    %2542 = vmatpush1.msra.mxu0 %v2485
    %2543 = vmatprep.subr.mxu0 0.0
    %2544 = vmatpush1.msra.mxu0 %v2486
    %2545 = vmatprep.subr.mxu0 0.0
    %2546 = vmatpush1.msra.mxu0 %v2487
    %2547 = vmatprep.subr.mxu0 0.0
    %2548 = vmatpush1.msra.mxu0 %v2488
    %2549 = vmatprep.subr.mxu0 0.0
    %2550 = vmatpush1.msra.mxu0 %v2489
    %2551 = vmatprep.subr.mxu0 0.0
    %2552 = vmatpush1.msra.mxu0 %v2490
    %2553 = vmatprep.subr.mxu0 0.0
    %2554 = vmatpush1.msra.mxu0 %v2491
    %2555 = vmatprep.subr.mxu0 0.0
    %2556 = vmatpush1.msra.mxu0 %v2492
    %2557 = vmatprep.mubr.f32.mxu0 %v2460
    %2558 = vmatmul.mubr.f32.gmra.mrb[0].mxu0 %v2459
    %v2559 = vpop.f32.mrb[0].mxu0
    %v2560 = vadd.f32 0.0, %v2559
    %v2561 = vpop.f32.mrb[0].mxu0
    %2562 = vdwg.mxu0
    %v2563 = vmul.f32 %v2560, 0.03125
    %v2564 = vmul.f32 %v2563, %v2563
    %v2566 = vrot.slane %v2564, 7
    %v2568 = vsub.f32 %v2563, %v2566
    %v2569 = vmax.f32 %v2568, 0.0
    %v2570 = vld [vmem:[%s5] sm:$0x1]
    %v2571 = vadd.f32 %v2569, 1e-05
    %v2572 = vrsqrt.pop %v2571
    %v2575 = vunpack.c.l.s4 1966171168
    %v2576 = vunpack.c.0.s8 %v2575
    %v2577 = vlaneseq
    %v2578 = vshrl.u32 %v2577, 7
    %v2579 = vsub.s32 %v2576, %v2578
    %v2580 = vrot.slane %v2572, %v2579
    %v2581 = vcombine.high %v2580, %v2580
    %v2583 = vunpack.c.l.s4 1966171168
    %v2584 = vunpack.c.0.s8 %v2583
    %v2585 = vlaneseq
    %v2586 = vshrl.u32 %v2585, 7
    %v2587 = vsub.s32 %v2584, %v2586
    %v2588 = vrot.slane %v2581, %v2587
    %v2590 = vmul.f32 %v2570, %v2588
    %v2591 = vld [vmem:[%s6] sm:$0x1]
    %v2592 = vmul.f32 %v2563, %v2590
    %v2593 = vsub.f32 %v2591, %v2592
    %v2595 = vlaneseq
    %v2596 = vshrl.u32 %v2595, 7
    %v2597 = vsub.s32 0, %v2596
    %v2598 = vrot.slane %v2593, %v2597
    %v2600 = vsel %vm2458, %v2590, %v2598
    %v2601 = vld [vmem:[%s4] sm:$0xff]
    %v2602 = vld [vmem:[%s4 + $0x8] sm:$0xff]
    %v2603 = vld [vmem:[%s4 + $0x10] sm:$0xff]
    %v2604 = vld [vmem:[%s4 + $0x18] sm:$0xff]
    %vm2605 = vcmask 130048
    %v2607 = vsel %vm2605, %v2600, 0
    %2609 = vmatprep.subr.mxu0 %v2602
    %2610 = vmatpush1.msra.mxu0 %v2601
    %2611 = vmatprep.subr.mxu0 %v2604
    %2612 = vmatpush1.msra.mxu0 %v2603
    %2613 = vmatprep.subr.mxu0 0.0
    %2614 = vmatpush1.msra.mxu0 0.0
    %2615 = vmatprep.subr.mxu0 0.0
    %2616 = vmatpush1.msra.mxu0 0.0
    %2617 = vmatprep.subr.mxu0 0.0
    %2618 = vmatpush1.msra.mxu0 0.0
    %2619 = vmatprep.subr.mxu0 0.0
    %2620 = vmatpush1.msra.mxu0 0.0
    %2621 = vmatprep.subr.mxu0 0.0
    %2622 = vmatpush1.msra.mxu0 0.0
    %2623 = vmatprep.subr.mxu0 0.0
    %2624 = vmatpush1.msra.mxu0 0.0
    %2625 = vmatprep.subr.mxu0 0.0
    %2626 = vmatpush1.msra.mxu0 0.0
    %2627 = vmatprep.subr.mxu0 0.0
    %2628 = vmatpush1.msra.mxu0 0.0
    %2629 = vmatprep.subr.mxu0 0.0
    %2630 = vmatpush1.msra.mxu0 0.0
    %2631 = vmatprep.subr.mxu0 0.0
    %2632 = vmatpush1.msra.mxu0 0.0
    %2633 = vmatprep.subr.mxu0 0.0
    %2634 = vmatpush1.msra.mxu0 0.0
    %2635 = vmatprep.subr.mxu0 0.0
    %2636 = vmatpush1.msra.mxu0 0.0
    %2637 = vmatprep.subr.mxu0 0.0
    %2638 = vmatpush1.msra.mxu0 0.0
    %2639 = vmatprep.subr.mxu0 0.0
    %2640 = vmatpush1.msra.mxu0 0.0
    %2641 = vmatprep.subr.mxu0 0.0
    %2642 = vmatpush1.msra.mxu0 0.0
    %2643 = vmatprep.subr.mxu0 0.0
    %2644 = vmatpush1.msra.mxu0 0.0
    %2645 = vmatprep.subr.mxu0 0.0
    %2646 = vmatpush1.msra.mxu0 0.0
    %2647 = vmatprep.subr.mxu0 0.0
    %2648 = vmatpush1.msra.mxu0 0.0
    %2649 = vmatprep.subr.mxu0 0.0
    %2650 = vmatpush1.msra.mxu0 0.0
    %2651 = vmatprep.subr.mxu0 0.0
    %2652 = vmatpush1.msra.mxu0 0.0
    %2653 = vmatprep.subr.mxu0 0.0
    %2654 = vmatpush1.msra.mxu0 0.0
    %2655 = vmatprep.subr.mxu0 0.0
    %2656 = vmatpush1.msra.mxu0 0.0
    %2657 = vmatprep.subr.mxu0 0.0
    %2658 = vmatpush1.msra.mxu0 0.0
    %2659 = vmatprep.subr.mxu0 0.0
    %2660 = vmatpush1.msra.mxu0 0.0
    %2661 = vmatprep.subr.mxu0 0.0
    %2662 = vmatpush1.msra.mxu0 0.0
    %2663 = vmatprep.subr.mxu0 0.0
    %2664 = vmatpush1.msra.mxu0 0.0
    %2665 = vmatprep.subr.mxu0 0.0
    %2666 = vmatpush1.msra.mxu0 0.0
    %2667 = vmatprep.subr.mxu0 0.0
    %2668 = vmatpush1.msra.mxu0 0.0
    %2669 = vmatprep.subr.mxu0 0.0
    %2670 = vmatpush1.msra.mxu0 0.0
    %2671 = vmatprep.subr.mxu0 0.0
    %2672 = vmatpush1.msra.mxu0 0.0
    %2673 = vmatprep.mubr.f32.mxu0 0.0
    %2674 = vmatmul.mubr.f32.gmra.mrb[0].mxu0 %v2607
    %v2675 = vpop.f32.mrb[0].mxu0
    %v2676 = vadd.f32 0.0, %v2675
    %v2677 = vpop.f32.mrb[0].mxu0
    %v2678 = vadd.f32 0.0, %v2677
    %2679 = vdwg.mxu0
    %v2680 = vlaneseq
    %v2681 = vshrl.u32 %v2680, 7
    %v2682 = vsub.s32 0, %v2681
    %v2683 = vrot.slane %v2676, %v2682
    %v2684 = vlaneseq
    %v2685 = vshrl.u32 %v2684, 7
    %v2686 = vsub.s32 0, %v2685
    %v2687 = vrot.slane %v2678, %v2686
    %v2688 = vmul.f32 %v2426, %v2683
    %v2689 = vmul.f32 %v2428, %v2687
    %v2690 = vlaneseq
    %v2691 = vshrl.u32 %v2690, 7
    %v2692 = vsub.s32 1, %v2691
    %v2693 = vrot.slane %v2676, %v2692
    %v2694 = vlaneseq
    %v2695 = vshrl.u32 %v2694, 7
    %v2696 = vsub.s32 1, %v2695
    %v2697 = vrot.slane %v2678, %v2696
    %v2698 = vadd.f32 %v2688, %v2693
    %v2699 = vadd.f32 %v2689, %v2697
    %v2700 = vmul.f32 %v2698, 0.2
    %v2701 = vmul.f32 %v2699, 0.2
    %v2702 = vmax.f32 %v2698, %v2700
    %v2703 = vmax.f32 %v2699, %v2701
    %v2704 = vpack.c.bf16 %v2702, %v2702
    %v2705 = vpack.c.bf16 %v2703, %v2703
    %v2706 = vld [vmem:[#allocation4] sm:$0xf]
    %v2707 = vld [vmem:[#allocation4 + $0x4] sm:$0xf]
    %v2708 = vld [vmem:[#allocation4 + $0x8] sm:$0xf]
    %v2709 = vld [vmem:[#allocation4 + $0xc] sm:$0xf]
    %v2710 = vld [vmem:[#allocation4 + $0x10] sm:$0xf]
    %v2711 = vld [vmem:[#allocation4 + $0x14] sm:$0xf]
    %v2712 = vld [vmem:[#allocation4 + $0x18] sm:$0xf]
    %v2713 = vld [vmem:[#allocation4 + $0x1c] sm:$0xf]
    %v2714 = vld [vmem:[#allocation4 + $0x20] sm:$0xf]
    %v2715 = vld [vmem:[#allocation4 + $0x24] sm:$0xf]
    %v2716 = vld [vmem:[#allocation4 + $0x28] sm:$0xf]
    %v2717 = vld [vmem:[#allocation4 + $0x2c] sm:$0xf]
    %v2718 = vld [vmem:[#allocation4 + $0x30] sm:$0xf]
    %v2719 = vld [vmem:[#allocation4 + $0x34] sm:$0xf]
    %v2720 = vld [vmem:[#allocation4 + $0x38] sm:$0xf]
    %v2721 = vld [vmem:[#allocation4 + $0x3c] sm:$0xf]
    %v2722 = vld [vmem:[#allocation4 + $0x40] sm:$0xf]
    %v2723 = vld [vmem:[#allocation4 + $0x44] sm:$0xf]
    %v2724 = vld [vmem:[#allocation4 + $0x48] sm:$0xf]
    %v2725 = vld [vmem:[#allocation4 + $0x4c] sm:$0xf]
    %v2726 = vld [vmem:[#allocation4 + $0x50] sm:$0xf]
    %v2727 = vld [vmem:[#allocation4 + $0x54] sm:$0xf]
    %v2728 = vld [vmem:[#allocation4 + $0x58] sm:$0xf]
    %v2729 = vld [vmem:[#allocation4 + $0x5c] sm:$0xf]
    %v2730 = vld [vmem:[#allocation4 + $0x60] sm:$0xf]
    %v2731 = vld [vmem:[#allocation4 + $0x64] sm:$0xf]
    %v2732 = vld [vmem:[#allocation4 + $0x68] sm:$0xf]
    %v2733 = vld [vmem:[#allocation4 + $0x6c] sm:$0xf]
    %v2734 = vld [vmem:[#allocation4 + $0x70] sm:$0xf]
    %v2735 = vld [vmem:[#allocation4 + $0x74] sm:$0xf]
    %v2736 = vld [vmem:[#allocation4 + $0x78] sm:$0xf]
    %v2737 = vld [vmem:[#allocation4 + $0x7c] sm:$0xf]
    %v2770 = vunpack.c.l.b16 %v2706
    %v2771 = vunpack.c.l.b16 %v2707
    %v2772 = vunpack.c.l.b16 %v2708
    %v2773 = vunpack.c.l.b16 %v2709
    %v2774 = vunpack.c.l.b16 %v2710
    %v2775 = vunpack.c.l.b16 %v2711
    %v2776 = vunpack.c.l.b16 %v2712
    %v2777 = vunpack.c.l.b16 %v2713
    %v2778 = vunpack.c.l.b16 %v2714
    %v2779 = vunpack.c.l.b16 %v2715
    %v2780 = vunpack.c.l.b16 %v2716
    %v2781 = vunpack.c.l.b16 %v2717
    %v2782 = vunpack.c.l.b16 %v2718
    %v2783 = vunpack.c.l.b16 %v2719
    %v2784 = vunpack.c.l.b16 %v2720
    %v2785 = vunpack.c.l.b16 %v2721
    %v2786 = vunpack.c.l.b16 %v2722
    %v2787 = vunpack.c.l.b16 %v2723
    %v2788 = vunpack.c.l.b16 %v2724
    %v2789 = vunpack.c.l.b16 %v2725
    %v2790 = vunpack.c.l.b16 %v2726
    %v2791 = vunpack.c.l.b16 %v2727
    %v2792 = vunpack.c.l.b16 %v2728
    %v2793 = vunpack.c.l.b16 %v2729
    %v2794 = vunpack.c.l.b16 %v2730
    %v2795 = vunpack.c.l.b16 %v2731
    %v2796 = vunpack.c.l.b16 %v2732
    %v2797 = vunpack.c.l.b16 %v2733
    %v2798 = vunpack.c.l.b16 %v2734
    %v2799 = vunpack.c.l.b16 %v2735
    %v2800 = vunpack.c.l.b16 %v2736
    %v2801 = vunpack.c.l.b16 %v2737
    %v2802 = vpack.c.b16 %v2771, %v2770
    %v2803 = vpack.c.b16 %v2773, %v2772
    %v2804 = vpack.c.b16 %v2775, %v2774
    %v2805 = vpack.c.b16 %v2777, %v2776
    %v2806 = vpack.c.b16 %v2779, %v2778
    %v2807 = vpack.c.b16 %v2781, %v2780
    %v2808 = vpack.c.b16 %v2783, %v2782
    %v2809 = vpack.c.b16 %v2785, %v2784
    %v2810 = vpack.c.b16 %v2787, %v2786
    %v2811 = vpack.c.b16 %v2789, %v2788
    %v2812 = vpack.c.b16 %v2791, %v2790
    %v2813 = vpack.c.b16 %v2793, %v2792
    %v2814 = vpack.c.b16 %v2795, %v2794
    %v2815 = vpack.c.b16 %v2797, %v2796
    %v2816 = vpack.c.b16 %v2799, %v2798
    %v2817 = vpack.c.b16 %v2801, %v2800
    %2834 = vmatprep.subr.bf16.mxu0 0
    %2835 = vmatpush1.bf16.msra.mxu0 %v2802
    %2836 = vmatprep.subr.bf16.mxu0 0
    %2837 = vmatpush1.bf16.msra.mxu0 %v2803
    %2838 = vmatprep.subr.bf16.mxu0 0
    %2839 = vmatpush1.bf16.msra.mxu0 %v2804
    %2840 = vmatprep.subr.bf16.mxu0 0
    %2841 = vmatpush1.bf16.msra.mxu0 %v2805
    %2842 = vmatprep.subr.bf16.mxu0 0
    %2843 = vmatpush1.bf16.msra.mxu0 %v2806
    %2844 = vmatprep.subr.bf16.mxu0 0
    %2845 = vmatpush1.bf16.msra.mxu0 %v2807
    %2846 = vmatprep.subr.bf16.mxu0 0
    %2847 = vmatpush1.bf16.msra.mxu0 %v2808
    %2848 = vmatprep.subr.bf16.mxu0 0
    %2849 = vmatpush1.bf16.msra.mxu0 %v2809
    %2850 = vmatprep.subr.bf16.mxu0 0
    %2851 = vmatpush1.bf16.msra.mxu0 %v2810
    %2852 = vmatprep.subr.bf16.mxu0 0
    %2853 = vmatpush1.bf16.msra.mxu0 %v2811
    %2854 = vmatprep.subr.bf16.mxu0 0
    %2855 = vmatpush1.bf16.msra.mxu0 %v2812
    %2856 = vmatprep.subr.bf16.mxu0 0
    %2857 = vmatpush1.bf16.msra.mxu0 %v2813
    %2858 = vmatprep.subr.bf16.mxu0 0
    %2859 = vmatpush1.bf16.msra.mxu0 %v2814
    %2860 = vmatprep.subr.bf16.mxu0 0
    %2861 = vmatpush1.bf16.msra.mxu0 %v2815
    %2862 = vmatprep.subr.bf16.mxu0 0
    %2863 = vmatpush1.bf16.msra.mxu0 %v2816
    %2864 = vmatprep.subr.bf16.mxu0 0
    %2865 = vmatpush1.bf16.msra.mxu0 %v2817
    %2866 = vmatprep.mubr.bf16.mxu0 %v2705
    %2867 = vmatmul.mubr.bf16.gmra.mrb[0].mxu0 %v2704
    %v2868 = vpop.f32.mrb[0].mxu0
    %v2869 = vadd.f32 0.0, %v2868
    %v2870 = vpop.f32.mrb[0].mxu0
    %v2871 = vpop.f32.mrb[0].mxu0
    %v2872 = vpop.f32.mrb[0].mxu0
    %2873 = vdwg.mxu0
    %2874 = vst [vmem:[%s8] sm:$0xff] %v2869
    // Predicated region
    $region42: #{discriminator_forward.1} parent=1 // pred_check
      _
    $region43: #{discriminator_forward.1} parent=1 // pred_check_branch
      %2876 = sbr.rel (0) target = $region45
    $region44: #{discriminator_forward.1} parent=1 // pred_region
      _
    $region45: #{discriminator_forward.1} parent=1 // pred_fallthru
      _
    // Predicated region
    $region46: #{discriminator_forward.1} parent=1 // pred_check
      _
    $region47: #{discriminator_forward.1} parent=1 // pred_check_branch
      %2878 = sbr.rel (0) target = $region49
    $region48: #{discriminator_forward.1} parent=1 // pred_region
      _
    $region49: #{discriminator_forward.1} parent=1 // pred_fallthru
      _
    %2879 = vsyncpa [#allocation3], 1
    %2880 = vsyncpa [#allocation5], 1

</llo_original>
